<compile_context>
chip_gen: v6e
topology: v6e:2x2x1
jax: 0.10.0
libtpu: 0.0.40
codegen_flags: <defaults>
</compile_context>

<pallas_src>
import functools

import jax
import jax.numpy as jnp
from jax import lax
from jax.experimental import pallas as pl
from jax.experimental.pallas import tpu as pltpu


def temporal_block_kernel(T, B, Bp, D, H,
                          xp_ref, wih_ref, bih_ref, whh_ref, bhh_ref,
                          wpf_ref, wpb_ref, mf_ref, mb_ref, bproj_ref,
                          o_ref, hw_ref):
    """Fused bidirectional GRU + projection.

    xp_ref    : [T*Bp, 2D]   row block i (8 rows) = [x(i) | x(T-1-i)], zero-padded
    wih_ref   : [2D, 6H]     direction-block-diagonal input weights,
                             gate columns interleaved (rf,rb,zf,zb,nf,nb)
    bih_ref   : [1, 6H]
    whh_ref   : [2H, 6H]     direction-block-diagonal recurrent weights (bf16)
    bhh_ref   : [1, 6H]
    wpf_ref   : [1, H, T*D]  W_proj[:H]  column-tiled T times
    wpb_ref   : [1, H, T*D]  W_proj[H:]  column-tiled T times
    mf_ref    : [T, 1, T*D]  fwd block mask: 1 where col//D == step
    mb_ref    : [T, 1, T*D]  bwd block mask: 1 where col//D == T-1-step
    bproj_ref : [1, T*D]
    o_ref     : [B, T*D]     lane-dense output
    hw_ref    : [Bp, T*2H]   scratch: hidden states, loop-step-major
    """
    H2, H4, H6 = 2 * H, 4 * H, 6 * H
    TD = T * D

    # ---- one fused input projection (both directions, all timesteps) ----
    # No per-step direction select needed: row block i already pairs forward
    # time i with backward time T-1-i, and wih is block-diagonal over the two
    # directions with gate-interleaved columns.
    xg = (jnp.dot(xp_ref[...], wih_ref[...],
                  preferred_element_type=jnp.float32)
          + bih_ref[...])                                      # [T*Bp, 6H]

    # ---- hoisted loop invariants ----
    whh = whh_ref[...]                                          # bf16 [2H, 6H]
    bhh = jnp.broadcast_to(bhh_ref[...], (Bp, H6))

    # ---- fused bidirectional recurrence, fully unrolled (T is static) ----
    # Carry h = [h_fwd(i) | h_bwd(T-1-i)]; one bf16 MXU matmul per step.
    h = jnp.zeros((Bp, H2), jnp.float32)
    for i in range(T):
        xg_t = xg[i * Bp:(i + 1) * Bp, :]                       # aligned slice
        hg = jnp.dot(h.astype(jnp.bfloat16), whh,
                     preferred_element_type=jnp.float32) + bhh  # [Bp, 6H]
        # PyTorch GRU cell, gate order (r, z, n), both directions at once.
        r = jax.nn.sigmoid(xg_t[:, 0:H2] + hg[:, 0:H2])
        z = jax.nn.sigmoid(xg_t[:, H2:H4] + hg[:, H2:H4])
        n = jnp.tanh(xg_t[:, H4:H6] + r * hg[:, H4:H6])
        h = (1.0 - z) * n + z * h
        hw_ref[:, i * H2:(i + 1) * H2] = h                      # one contiguous store

    # ---- rebuild the row-permuted block-diagonal projection in-kernel ----
    # P[s*2H + rr, c] = Wproj[rr, c%D] * (c//D == s)        for rr <  H (fwd)
    #                 = Wproj[rr, c%D] * (c//D == T-1-s)    for rr >= H (bwd)
    pf = mf_ref[...] * wpf_ref[...]                             # [T, H, TD]
    pb = mb_ref[...] * wpb_ref[...]                             # [T, H, TD]
    p_full = jnp.concatenate([pf, pb], axis=1).reshape(T * H2, TD)

    # ---- single lane-dense projection matmul -> [B, T*D] output ----
    res = (jnp.dot(hw_ref[...], p_full, preferred_element_type=jnp.float32)
           + bproj_ref[...])                                    # [Bp, TD]
    o_ref[...] = res[0:B, :]


def _interleave_gates(wf, wb, H):
    """[.., 3H] x 2 -> [.., 6H] with column order (rf, rb, zf, zb, nf, nb)."""
    return jnp.concatenate([wf[:, 0:H],         wb[:, 0:H],
                            wf[:, H:2 * H],     wb[:, H:2 * H],
                            wf[:, 2 * H:3 * H], wb[:, 2 * H:3 * H]], axis=1)


def fuse_temporal_block_params(params, time_steps=16):
    """One-time weight fusion (do NOT call per step / per forward pass)."""
    T = time_steps
    H = params["whh_f"].shape[0]
    D = params["wih_f"].shape[0]
    f32 = jnp.float32

    zD = jnp.zeros((D, 3 * H), f32)
    zH = jnp.zeros((H, 3 * H), f32)
    # Direction-block-diagonal weights with gate-interleaved columns.
    wih = _interleave_gates(jnp.concatenate([params["wih_f"], zD], axis=0),
                            jnp.concatenate([zD, params["wih_b"]], axis=0), H)  # [2D,6H]
    whh = _interleave_gates(jnp.concatenate([params["whh_f"], zH], axis=0),
                            jnp.concatenate([zH, params["whh_b"]], axis=0), H)  # [2H,6H]
    bih = _interleave_gates(params["bih_f"], params["bih_b"], H)                # [1,6H]
    bhh = _interleave_gates(params["bhh_f"], params["bhh_b"], H)                # [1,6H]

    # Column-tiled projection halves + fwd/bwd block-diag masks (tiny inputs;
    # the full 256 KiB block-diagonal weight is rebuilt in-kernel).
    wpf = jnp.tile(params["wproj"][:H, :], (1, T))[None, :, :]   # [1, H, T*D]
    wpb = jnp.tile(params["wproj"][H:, :], (1, T))[None, :, :]   # [1, H, T*D]
    s = jnp.arange(T)[:, None]
    cb = (jnp.arange(T * D) // D)[None, :]
    mf = (cb == s).astype(f32)[:, None, :]                       # [T, 1, T*D]
    mb = (cb == (T - 1 - s)).astype(f32)[:, None, :]             # [T, 1, T*D]
    bproj = jnp.tile(params["bproj"], (1, T))                    # [1, T*D]

    return {
        "wih": wih.astype(f32), "bih": bih.astype(f32),
        "whh": whh.astype(jnp.bfloat16), "bhh": bhh.astype(f32),
        "wpf": wpf.astype(f32), "wpb": wpb.astype(f32),
        "mf": mf, "mb": mb, "bproj": bproj.astype(f32),
    }


def temporal_block(x, fused):
    """x: [B, N] with N = T * features_per_step. Returns [B, N]."""
    f32 = jnp.float32
    T = fused["mf"].shape[0]
    D = fused["mf"].shape[2] // T
    H = fused["wpf"].shape[1]
    B, N = x.shape
    assert N == T * D, (N, T, D)
    Bp = max(8, ((B + 7) // 8) * 8)   # pad each timestep to full sublane groups

    # Time-major paired input: row block i = [x(i) | x(T-1-i)], zero-padded rows.
    x3 = x.astype(f32).reshape(B, T, D)
    xp = jnp.concatenate([x3, jnp.flip(x3, axis=1)], axis=-1)    # [B, T, 2D]
    xp = jnp.transpose(xp, (1, 0, 2))                            # [T, B, 2D]
    xp = jnp.pad(xp, ((0, 0), (0, Bp - B), (0, 0)))              # [T, Bp, 2D]
    x_pair = xp.reshape(T * Bp, 2 * D)

    kernel = functools.partial(temporal_block_kernel, T, B, Bp, D, H)
    vmem = pl.BlockSpec(memory_space=pltpu.MemorySpace.VMEM)
    out = pl.pallas_call(
        kernel,
        out_shape=jax.ShapeDtypeStruct((B, T * D), f32),
        in_specs=[vmem] * 10,
        out_specs=vmem,
        scratch_shapes=[pltpu.VMEM((Bp, T * 2 * H), f32)],       # hidden states
    )(x_pair, fused["wih"], fused["bih"], fused["whh"], fused["bhh"],
      fused["wpf"], fused["wpb"], fused["mf"], fused["mb"], fused["bproj"])
    return out


# ---------------- pure-JAX reference (for correctness check) ----------------
def temporal_block_ref(x, params, time_steps=16):
    B, N = x.shape
    T = time_steps
    D = N // T
    H = params["whh_f"].shape[0]
    xs = x.reshape(B, T, D).transpose(1, 0, 2)  # [T, B, D]

    def run_dir(wih, whh, bih, bhh, reverse):
        def step(h, x_t):
            xg = x_t @ wih + bih[0]
            hg = h @ whh + bhh[0]
            r = jax.nn.sigmoid(xg[:, :H] + hg[:, :H])
            z = jax.nn.sigmoid(xg[:, H:2 * H] + hg[:, H:2 * H])
            n = jnp.tanh(xg[:, 2 * H:] + r * hg[:, 2 * H:])
            h_new = (1.0 - z) * n + z * h
            return h_new, h_new

        h0 = jnp.zeros((B, H), jnp.float32)
        _, hs = lax.scan(step, h0, xs, reverse=reverse)
        return hs  # [T, B, H]

    hf = run_dir(params["wih_f"], params["whh_f"],
                 params["bih_f"], params["bhh_f"], reverse=False)
    hb = run_dir(params["wih_b"], params["whh_b"],
                 params["bih_b"], params["bhh_b"], reverse=True)
    hcat = jnp.concatenate([hf, hb], axis=-1)                 # [T, B, 2H]
    out = hcat @ params["wproj"] + params["bproj"][0]         # [T, B, D]
    return out.transpose(1, 0, 2).reshape(B, -1)


def init_params(key, input_dim, hidden_dim):
    """Deterministic init mimicking PyTorch GRU/Linear uniform(-k, k)."""
    D, H = input_dim, hidden_dim
    ks = jax.random.split(key, 11)
    kg = 1.0 / jnp.sqrt(H)          # GRU init scale
    kl = 1.0 / jnp.sqrt(2.0 * H)    # Linear init scale (fan_in = 2H)
    u = lambda k, shape, s: jax.random.uniform(k, shape, jnp.float32, -s, s)
    return {
        # forward direction (weights stored transposed: [in, out], gates r,z,n)
        "wih_f": u(ks[0], (D, 3 * H), kg),
        "whh_f": u(ks[1], (H, 3 * H), kg),
        "bih_f": u(ks[2], (1, 3 * H), kg),
        "bhh_f": u(ks[3], (1, 3 * H), kg),
        # backward direction
        "wih_b": u(ks[4], (D, 3 * H), kg),
        "whh_b": u(ks[5], (H, 3 * H), kg),
        "bih_b": u(ks[6], (1, 3 * H), kg),
        "bhh_b": u(ks[7], (1, 3 * H), kg),
        # projection Linear(2H -> D)
        "wproj": u(ks[8], (2 * H, D), kl),
        "bproj": u(ks[9], (1, D), kl),
    }


if __name__ == "__main__":
    B = 2            # batch
    T = 16           # time_steps (hard-coded in the PyTorch forward)
    D = 8            # features_per_step == GRU input_dim
    H = 16           # hidden_dim (bidirectional -> output_dim = 32)

    key = jax.random.PRNGKey(0)
    kx, kp = jax.random.split(key)
    x = jax.random.normal(kx, (B, T * D), jnp.float32)   # [2, 128]
    params = init_params(kp, D, H)

    # One-time weight fusion (kept OUTSIDE the per-call jitted path).
    fused = fuse_temporal_block_params(params, time_steps=T)
    fused = jax.tree_util.tree_map(jnp.asarray, fused)

    run = jax.jit(temporal_block)
    y = run(x, fused)
    jax.block_until_ready(y)

    y_ref = temporal_block_ref(x, params, time_steps=T)
    assert y.shape == (B, T * D), y.shape
    # Tolerance relaxed to cover the bf16 recurrent-matmul operands.
    max_err = float(jnp.max(jnp.abs(y - y_ref)))
    assert jnp.allclose(y, y_ref, rtol=2e-2, atol=2e-2), max_err

    print("KERNEL_OK")
</pallas_src>

<mosaic_0001>
module attributes {stable_mosaic.version = 11 : i64} {
  func.func @temporal_block_kernel(%arg0: memref<128x16xf32, #tpu.memory_space<vmem>>, %arg1: memref<16x96xf32, #tpu.memory_space<vmem>>, %arg2: memref<1x96xf32, #tpu.memory_space<vmem>>, %arg3: memref<32x96xbf16, #tpu.memory_space<vmem>>, %arg4: memref<1x96xf32, #tpu.memory_space<vmem>>, %arg5: memref<1x16x128xf32, #tpu.memory_space<vmem>>, %arg6: memref<1x16x128xf32, #tpu.memory_space<vmem>>, %arg7: memref<16x1x128xf32, #tpu.memory_space<vmem>>, %arg8: memref<16x1x128xf32, #tpu.memory_space<vmem>>, %arg9: memref<1x128xf32, #tpu.memory_space<vmem>>, %arg10: memref<2x128xf32, #tpu.memory_space<vmem>>, %arg11: memref<8x512xf32, #tpu.memory_space<vmem>>) attributes {dimension_semantics = [], scalar_prefetch = 0 : i64, scratch_operands = 1 : i64, tpu.core_type = #tpu.core_type<tc>} {
    %c0 = arith.constant 0 : index
    %c0_0 = arith.constant 0 : index
    %0 = vector.load %arg0[%c0, %c0_0] : memref<128x16xf32, #tpu.memory_space<vmem>>, vector<128x16xf32>
    %c0_1 = arith.constant 0 : index
    %c0_2 = arith.constant 0 : index
    %1 = vector.load %arg1[%c0_1, %c0_2] : memref<16x96xf32, #tpu.memory_space<vmem>>, vector<16x96xf32>
    %cst = arith.constant dense<0.000000e+00> : vector<128x96xf32>
    %2 = tpu.matmul %0, %1, %cst {dimension_numbers = #tpu.dot_dimension_numbers<[1], [0], [0], [1], [0, 0, 1, 1], [], []>} : vector<128x16xf32>, vector<16x96xf32>, vector<128x96xf32> -> vector<128x96xf32>
    %c0_3 = arith.constant 0 : index
    %c0_4 = arith.constant 0 : index
    %3 = vector.load %arg2[%c0_3, %c0_4] : memref<1x96xf32, #tpu.memory_space<vmem>>, vector<1x96xf32>
    %4 = vector.broadcast %3 : vector<1x96xf32> to vector<128x96xf32>
    %5 = arith.addf %2, %4 : vector<128x96xf32>
    %c0_5 = arith.constant 0 : index
    %c0_6 = arith.constant 0 : index
    %6 = vector.load %arg3[%c0_5, %c0_6] : memref<32x96xbf16, #tpu.memory_space<vmem>>, vector<32x96xbf16>
    %c0_7 = arith.constant 0 : index
    %c0_8 = arith.constant 0 : index
    %7 = vector.load %arg4[%c0_7, %c0_8] : memref<1x96xf32, #tpu.memory_space<vmem>>, vector<1x96xf32>
    %8 = vector.shape_cast %7 : vector<1x96xf32> to vector<1x96xf32>
    %9 = vector.broadcast %8 : vector<1x96xf32> to vector<8x96xf32>
    %cst_9 = arith.constant 0.000000e+00 : f32
    %10 = vector.broadcast %cst_9 : f32 to vector<8x32xf32>
    %11 = vector.extract_strided_slice %5 {offsets = [0, 0], sizes = [8, 96], strides = [1, 1]} : vector<128x96xf32> to vector<8x96xf32>
    %12 = arith.truncf %10 : vector<8x32xf32> to vector<8x32xbf16>
    %cst_10 = arith.constant dense<0.000000e+00> : vector<8x96xf32>
    %13 = tpu.matmul %12, %6, %cst_10 {dimension_numbers = #tpu.dot_dimension_numbers<[1], [0], [0], [1], [0, 0, 1, 1], [], []>} : vector<8x32xbf16>, vector<32x96xbf16>, vector<8x96xf32> -> vector<8x96xf32>
    %14 = arith.addf %13, %9 : vector<8x96xf32>
    %15 = vector.extract_strided_slice %11 {offsets = [0, 0], sizes = [8, 32], strides = [1, 1]} : vector<8x96xf32> to vector<8x32xf32>
    %16 = vector.extract_strided_slice %14 {offsets = [0, 0], sizes = [8, 32], strides = [1, 1]} : vector<8x96xf32> to vector<8x32xf32>
    %17 = arith.addf %15, %16 : vector<8x32xf32>
    %18 = arith.negf %17 : vector<8x32xf32>
    %19 = math.exp %18 : vector<8x32xf32>
    %cst_11 = arith.constant 1.000000e+00 : f32
    %20 = vector.broadcast %cst_11 : f32 to vector<8x32xf32>
    %21 = arith.addf %20, %19 : vector<8x32xf32>
    %22 = arith.divf %20, %21 : vector<8x32xf32>
    %23 = vector.extract_strided_slice %11 {offsets = [0, 32], sizes = [8, 32], strides = [1, 1]} : vector<8x96xf32> to vector<8x32xf32>
    %24 = vector.extract_strided_slice %14 {offsets = [0, 32], sizes = [8, 32], strides = [1, 1]} : vector<8x96xf32> to vector<8x32xf32>
    %25 = arith.addf %23, %24 : vector<8x32xf32>
    %26 = arith.negf %25 : vector<8x32xf32>
    %27 = math.exp %26 : vector<8x32xf32>
    %cst_12 = arith.constant 1.000000e+00 : f32
    %28 = vector.broadcast %cst_12 : f32 to vector<8x32xf32>
    %29 = arith.addf %28, %27 : vector<8x32xf32>
    %30 = arith.divf %28, %29 : vector<8x32xf32>
    %31 = vector.extract_strided_slice %11 {offsets = [0, 64], sizes = [8, 32], strides = [1, 1]} : vector<8x96xf32> to vector<8x32xf32>
    %32 = vector.extract_strided_slice %14 {offsets = [0, 64], sizes = [8, 32], strides = [1, 1]} : vector<8x96xf32> to vector<8x32xf32>
    %33 = arith.mulf %22, %32 : vector<8x32xf32>
    %34 = arith.addf %31, %33 : vector<8x32xf32>
    %35 = math.tanh %34 : vector<8x32xf32>
    %cst_13 = arith.constant 1.000000e+00 : f32
    %36 = vector.broadcast %cst_13 : f32 to vector<8x32xf32>
    %37 = arith.subf %36, %30 : vector<8x32xf32>
    %38 = arith.mulf %37, %35 : vector<8x32xf32>
    %39 = arith.mulf %30, %10 : vector<8x32xf32>
    %40 = arith.addf %38, %39 : vector<8x32xf32>
    %c0_14 = arith.constant 0 : index
    %c0_15 = arith.constant 0 : index
    %41 = vector.load %arg11[%c0_14, %c0_15] : memref<8x512xf32, #tpu.memory_space<vmem>>, vector<8x32xf32>
    tpu.vector_store %arg11[%c0_14, %c0_15], %40 {strides = array<i32>} : memref<8x512xf32, #tpu.memory_space<vmem>>, vector<8x32xf32>,
    %42 = vector.extract_strided_slice %5 {offsets = [8, 0], sizes = [8, 96], strides = [1, 1]} : vector<128x96xf32> to vector<8x96xf32>
    %43 = arith.truncf %40 : vector<8x32xf32> to vector<8x32xbf16>
    %cst_16 = arith.constant dense<0.000000e+00> : vector<8x96xf32>
    %44 = tpu.matmul %43, %6, %cst_16 {dimension_numbers = #tpu.dot_dimension_numbers<[1], [0], [0], [1], [0, 0, 1, 1], [], []>} : vector<8x32xbf16>, vector<32x96xbf16>, vector<8x96xf32> -> vector<8x96xf32>
    %45 = arith.addf %44, %9 : vector<8x96xf32>
    %46 = vector.extract_strided_slice %42 {offsets = [0, 0], sizes = [8, 32], strides = [1, 1]} : vector<8x96xf32> to vector<8x32xf32>
    %47 = vector.extract_strided_slice %45 {offsets = [0, 0], sizes = [8, 32], strides = [1, 1]} : vector<8x96xf32> to vector<8x32xf32>
    %48 = arith.addf %46, %47 : vector<8x32xf32>
    %49 = arith.negf %48 : vector<8x32xf32>
    %50 = math.exp %49 : vector<8x32xf32>
    %cst_17 = arith.constant 1.000000e+00 : f32
    %51 = vector.broadcast %cst_17 : f32 to vector<8x32xf32>
    %52 = arith.addf %51, %50 : vector<8x32xf32>
    %53 = arith.divf %51, %52 : vector<8x32xf32>
    %54 = vector.extract_strided_slice %42 {offsets = [0, 32], sizes = [8, 32], strides = [1, 1]} : vector<8x96xf32> to vector<8x32xf32>
    %55 = vector.extract_strided_slice %45 {offsets = [0, 32], sizes = [8, 32], strides = [1, 1]} : vector<8x96xf32> to vector<8x32xf32>
    %56 = arith.addf %54, %55 : vector<8x32xf32>
    %57 = arith.negf %56 : vector<8x32xf32>
    %58 = math.exp %57 : vector<8x32xf32>
    %cst_18 = arith.constant 1.000000e+00 : f32
    %59 = vector.broadcast %cst_18 : f32 to vector<8x32xf32>
    %60 = arith.addf %59, %58 : vector<8x32xf32>
    %61 = arith.divf %59, %60 : vector<8x32xf32>
    %62 = vector.extract_strided_slice %42 {offsets = [0, 64], sizes = [8, 32], strides = [1, 1]} : vector<8x96xf32> to vector<8x32xf32>
    %63 = vector.extract_strided_slice %45 {offsets = [0, 64], sizes = [8, 32], strides = [1, 1]} : vector<8x96xf32> to vector<8x32xf32>
    %64 = arith.mulf %53, %63 : vector<8x32xf32>
    %65 = arith.addf %62, %64 : vector<8x32xf32>
    %66 = math.tanh %65 : vector<8x32xf32>
    %cst_19 = arith.constant 1.000000e+00 : f32
    %67 = vector.broadcast %cst_19 : f32 to vector<8x32xf32>
    %68 = arith.subf %67, %61 : vector<8x32xf32>
    %69 = arith.mulf %68, %66 : vector<8x32xf32>
    %70 = arith.mulf %61, %40 : vector<8x32xf32>
    %71 = arith.addf %69, %70 : vector<8x32xf32>
    %c0_20 = arith.constant 0 : index
    %c32 = arith.constant 32 : index
    %72 = vector.load %arg11[%c0_20, %c32] : memref<8x512xf32, #tpu.memory_space<vmem>>, vector<8x32xf32>
    tpu.vector_store %arg11[%c0_20, %c32], %71 {strides = array<i32>} : memref<8x512xf32, #tpu.memory_space<vmem>>, vector<8x32xf32>,
    %73 = vector.extract_strided_slice %5 {offsets = [16, 0], sizes = [8, 96], strides = [1, 1]} : vector<128x96xf32> to vector<8x96xf32>
    %74 = arith.truncf %71 : vector<8x32xf32> to vector<8x32xbf16>
    %cst_21 = arith.constant dense<0.000000e+00> : vector<8x96xf32>
    %75 = tpu.matmul %74, %6, %cst_21 {dimension_numbers = #tpu.dot_dimension_numbers<[1], [0], [0], [1], [0, 0, 1, 1], [], []>} : vector<8x32xbf16>, vector<32x96xbf16>, vector<8x96xf32> -> vector<8x96xf32>
    %76 = arith.addf %75, %9 : vector<8x96xf32>
    %77 = vector.extract_strided_slice %73 {offsets = [0, 0], sizes = [8, 32], strides = [1, 1]} : vector<8x96xf32> to vector<8x32xf32>
    %78 = vector.extract_strided_slice %76 {offsets = [0, 0], sizes = [8, 32], strides = [1, 1]} : vector<8x96xf32> to vector<8x32xf32>
    %79 = arith.addf %77, %78 : vector<8x32xf32>
    %80 = arith.negf %79 : vector<8x32xf32>
    %81 = math.exp %80 : vector<8x32xf32>
    %cst_22 = arith.constant 1.000000e+00 : f32
    %82 = vector.broadcast %cst_22 : f32 to vector<8x32xf32>
    %83 = arith.addf %82, %81 : vector<8x32xf32>
    %84 = arith.divf %82, %83 : vector<8x32xf32>
    %85 = vector.extract_strided_slice %73 {offsets = [0, 32], sizes = [8, 32], strides = [1, 1]} : vector<8x96xf32> to vector<8x32xf32>
    %86 = vector.extract_strided_slice %76 {offsets = [0, 32], sizes = [8, 32], strides = [1, 1]} : vector<8x96xf32> to vector<8x32xf32>
    %87 = arith.addf %85, %86 : vector<8x32xf32>
    %88 = arith.negf %87 : vector<8x32xf32>
    %89 = math.exp %88 : vector<8x32xf32>
    %cst_23 = arith.constant 1.000000e+00 : f32
    %90 = vector.broadcast %cst_23 : f32 to vector<8x32xf32>
    %91 = arith.addf %90, %89 : vector<8x32xf32>
    %92 = arith.divf %90, %91 : vector<8x32xf32>
    %93 = vector.extract_strided_slice %73 {offsets = [0, 64], sizes = [8, 32], strides = [1, 1]} : vector<8x96xf32> to vector<8x32xf32>
    %94 = vector.extract_strided_slice %76 {offsets = [0, 64], sizes = [8, 32], strides = [1, 1]} : vector<8x96xf32> to vector<8x32xf32>
    %95 = arith.mulf %84, %94 : vector<8x32xf32>
    %96 = arith.addf %93, %95 : vector<8x32xf32>
    %97 = math.tanh %96 : vector<8x32xf32>
    %cst_24 = arith.constant 1.000000e+00 : f32
    %98 = vector.broadcast %cst_24 : f32 to vector<8x32xf32>
    %99 = arith.subf %98, %92 : vector<8x32xf32>
    %100 = arith.mulf %99, %97 : vector<8x32xf32>
    %101 = arith.mulf %92, %71 : vector<8x32xf32>
    %102 = arith.addf %100, %101 : vector<8x32xf32>
    %c0_25 = arith.constant 0 : index
    %c64 = arith.constant 64 : index
    %103 = vector.load %arg11[%c0_25, %c64] : memref<8x512xf32, #tpu.memory_space<vmem>>, vector<8x32xf32>
    tpu.vector_store %arg11[%c0_25, %c64], %102 {strides = array<i32>} : memref<8x512xf32, #tpu.memory_space<vmem>>, vector<8x32xf32>,
    %104 = vector.extract_strided_slice %5 {offsets = [24, 0], sizes = [8, 96], strides = [1, 1]} : vector<128x96xf32> to vector<8x96xf32>
    %105 = arith.truncf %102 : vector<8x32xf32> to vector<8x32xbf16>
    %cst_26 = arith.constant dense<0.000000e+00> : vector<8x96xf32>
    %106 = tpu.matmul %105, %6, %cst_26 {dimension_numbers = #tpu.dot_dimension_numbers<[1], [0], [0], [1], [0, 0, 1, 1], [], []>} : vector<8x32xbf16>, vector<32x96xbf16>, vector<8x96xf32> -> vector<8x96xf32>
    %107 = arith.addf %106, %9 : vector<8x96xf32>
    %108 = vector.extract_strided_slice %104 {offsets = [0, 0], sizes = [8, 32], strides = [1, 1]} : vector<8x96xf32> to vector<8x32xf32>
    %109 = vector.extract_strided_slice %107 {offsets = [0, 0], sizes = [8, 32], strides = [1, 1]} : vector<8x96xf32> to vector<8x32xf32>
    %110 = arith.addf %108, %109 : vector<8x32xf32>
    %111 = arith.negf %110 : vector<8x32xf32>
    %112 = math.exp %111 : vector<8x32xf32>
    %cst_27 = arith.constant 1.000000e+00 : f32
    %113 = vector.broadcast %cst_27 : f32 to vector<8x32xf32>
    %114 = arith.addf %113, %112 : vector<8x32xf32>
    %115 = arith.divf %113, %114 : vector<8x32xf32>
    %116 = vector.extract_strided_slice %104 {offsets = [0, 32], sizes = [8, 32], strides = [1, 1]} : vector<8x96xf32> to vector<8x32xf32>
    %117 = vector.extract_strided_slice %107 {offsets = [0, 32], sizes = [8, 32], strides = [1, 1]} : vector<8x96xf32> to vector<8x32xf32>
    %118 = arith.addf %116, %117 : vector<8x32xf32>
    %119 = arith.negf %118 : vector<8x32xf32>
    %120 = math.exp %119 : vector<8x32xf32>
    %cst_28 = arith.constant 1.000000e+00 : f32
    %121 = vector.broadcast %cst_28 : f32 to vector<8x32xf32>
    %122 = arith.addf %121, %120 : vector<8x32xf32>
    %123 = arith.divf %121, %122 : vector<8x32xf32>
    %124 = vector.extract_strided_slice %104 {offsets = [0, 64], sizes = [8, 32], strides = [1, 1]} : vector<8x96xf32> to vector<8x32xf32>
    %125 = vector.extract_strided_slice %107 {offsets = [0, 64], sizes = [8, 32], strides = [1, 1]} : vector<8x96xf32> to vector<8x32xf32>
    %126 = arith.mulf %115, %125 : vector<8x32xf32>
    %127 = arith.addf %124, %126 : vector<8x32xf32>
    %128 = math.tanh %127 : vector<8x32xf32>
    %cst_29 = arith.constant 1.000000e+00 : f32
    %129 = vector.broadcast %cst_29 : f32 to vector<8x32xf32>
    %130 = arith.subf %129, %123 : vector<8x32xf32>
    %131 = arith.mulf %130, %128 : vector<8x32xf32>
    %132 = arith.mulf %123, %102 : vector<8x32xf32>
    %133 = arith.addf %131, %132 : vector<8x32xf32>
    %c0_30 = arith.constant 0 : index
    %c96 = arith.constant 96 : index
    %134 = vector.load %arg11[%c0_30, %c96] : memref<8x512xf32, #tpu.memory_space<vmem>>, vector<8x32xf32>
    tpu.vector_store %arg11[%c0_30, %c96], %133 {strides = array<i32>} : memref<8x512xf32, #tpu.memory_space<vmem>>, vector<8x32xf32>,
    %135 = vector.extract_strided_slice %5 {offsets = [32, 0], sizes = [8, 96], strides = [1, 1]} : vector<128x96xf32> to vector<8x96xf32>
    %136 = arith.truncf %133 : vector<8x32xf32> to vector<8x32xbf16>
    %cst_31 = arith.constant dense<0.000000e+00> : vector<8x96xf32>
    %137 = tpu.matmul %136, %6, %cst_31 {dimension_numbers = #tpu.dot_dimension_numbers<[1], [0], [0], [1], [0, 0, 1, 1], [], []>} : vector<8x32xbf16>, vector<32x96xbf16>, vector<8x96xf32> -> vector<8x96xf32>
    %138 = arith.addf %137, %9 : vector<8x96xf32>
    %139 = vector.extract_strided_slice %135 {offsets = [0, 0], sizes = [8, 32], strides = [1, 1]} : vector<8x96xf32> to vector<8x32xf32>
    %140 = vector.extract_strided_slice %138 {offsets = [0, 0], sizes = [8, 32], strides = [1, 1]} : vector<8x96xf32> to vector<8x32xf32>
    %141 = arith.addf %139, %140 : vector<8x32xf32>
    %142 = arith.negf %141 : vector<8x32xf32>
    %143 = math.exp %142 : vector<8x32xf32>
    %cst_32 = arith.constant 1.000000e+00 : f32
    %144 = vector.broadcast %cst_32 : f32 to vector<8x32xf32>
    %145 = arith.addf %144, %143 : vector<8x32xf32>
    %146 = arith.divf %144, %145 : vector<8x32xf32>
    %147 = vector.extract_strided_slice %135 {offsets = [0, 32], sizes = [8, 32], strides = [1, 1]} : vector<8x96xf32> to vector<8x32xf32>
    %148 = vector.extract_strided_slice %138 {offsets = [0, 32], sizes = [8, 32], strides = [1, 1]} : vector<8x96xf32> to vector<8x32xf32>
    %149 = arith.addf %147, %148 : vector<8x32xf32>
    %150 = arith.negf %149 : vector<8x32xf32>
    %151 = math.exp %150 : vector<8x32xf32>
    %cst_33 = arith.constant 1.000000e+00 : f32
    %152 = vector.broadcast %cst_33 : f32 to vector<8x32xf32>
    %153 = arith.addf %152, %151 : vector<8x32xf32>
    %154 = arith.divf %152, %153 : vector<8x32xf32>
    %155 = vector.extract_strided_slice %135 {offsets = [0, 64], sizes = [8, 32], strides = [1, 1]} : vector<8x96xf32> to vector<8x32xf32>
    %156 = vector.extract_strided_slice %138 {offsets = [0, 64], sizes = [8, 32], strides = [1, 1]} : vector<8x96xf32> to vector<8x32xf32>
    %157 = arith.mulf %146, %156 : vector<8x32xf32>
    %158 = arith.addf %155, %157 : vector<8x32xf32>
    %159 = math.tanh %158 : vector<8x32xf32>
    %cst_34 = arith.constant 1.000000e+00 : f32
    %160 = vector.broadcast %cst_34 : f32 to vector<8x32xf32>
    %161 = arith.subf %160, %154 : vector<8x32xf32>
    %162 = arith.mulf %161, %159 : vector<8x32xf32>
    %163 = arith.mulf %154, %133 : vector<8x32xf32>
    %164 = arith.addf %162, %163 : vector<8x32xf32>
    %c0_35 = arith.constant 0 : index
    %c128 = arith.constant 128 : index
    %165 = vector.load %arg11[%c0_35, %c128] : memref<8x512xf32, #tpu.memory_space<vmem>>, vector<8x32xf32>
    tpu.vector_store %arg11[%c0_35, %c128], %164 {strides = array<i32>} : memref<8x512xf32, #tpu.memory_space<vmem>>, vector<8x32xf32>,
    %166 = vector.extract_strided_slice %5 {offsets = [40, 0], sizes = [8, 96], strides = [1, 1]} : vector<128x96xf32> to vector<8x96xf32>
    %167 = arith.truncf %164 : vector<8x32xf32> to vector<8x32xbf16>
    %cst_36 = arith.constant dense<0.000000e+00> : vector<8x96xf32>
    %168 = tpu.matmul %167, %6, %cst_36 {dimension_numbers = #tpu.dot_dimension_numbers<[1], [0], [0], [1], [0, 0, 1, 1], [], []>} : vector<8x32xbf16>, vector<32x96xbf16>, vector<8x96xf32> -> vector<8x96xf32>
    %169 = arith.addf %168, %9 : vector<8x96xf32>
    %170 = vector.extract_strided_slice %166 {offsets = [0, 0], sizes = [8, 32], strides = [1, 1]} : vector<8x96xf32> to vector<8x32xf32>
    %171 = vector.extract_strided_slice %169 {offsets = [0, 0], sizes = [8, 32], strides = [1, 1]} : vector<8x96xf32> to vector<8x32xf32>
    %172 = arith.addf %170, %171 : vector<8x32xf32>
    %173 = arith.negf %172 : vector<8x32xf32>
    %174 = math.exp %173 : vector<8x32xf32>
    %cst_37 = arith.constant 1.000000e+00 : f32
    %175 = vector.broadcast %cst_37 : f32 to vector<8x32xf32>
    %176 = arith.addf %175, %174 : vector<8x32xf32>
    %177 = arith.divf %175, %176 : vector<8x32xf32>
    %178 = vector.extract_strided_slice %166 {offsets = [0, 32], sizes = [8, 32], strides = [1, 1]} : vector<8x96xf32> to vector<8x32xf32>
    %179 = vector.extract_strided_slice %169 {offsets = [0, 32], sizes = [8, 32], strides = [1, 1]} : vector<8x96xf32> to vector<8x32xf32>
    %180 = arith.addf %178, %179 : vector<8x32xf32>
    %181 = arith.negf %180 : vector<8x32xf32>
    %182 = math.exp %181 : vector<8x32xf32>
    %cst_38 = arith.constant 1.000000e+00 : f32
    %183 = vector.broadcast %cst_38 : f32 to vector<8x32xf32>
    %184 = arith.addf %183, %182 : vector<8x32xf32>
    %185 = arith.divf %183, %184 : vector<8x32xf32>
    %186 = vector.extract_strided_slice %166 {offsets = [0, 64], sizes = [8, 32], strides = [1, 1]} : vector<8x96xf32> to vector<8x32xf32>
    %187 = vector.extract_strided_slice %169 {offsets = [0, 64], sizes = [8, 32], strides = [1, 1]} : vector<8x96xf32> to vector<8x32xf32>
    %188 = arith.mulf %177, %187 : vector<8x32xf32>
    %189 = arith.addf %186, %188 : vector<8x32xf32>
    %190 = math.tanh %189 : vector<8x32xf32>
    %cst_39 = arith.constant 1.000000e+00 : f32
    %191 = vector.broadcast %cst_39 : f32 to vector<8x32xf32>
    %192 = arith.subf %191, %185 : vector<8x32xf32>
    %193 = arith.mulf %192, %190 : vector<8x32xf32>
    %194 = arith.mulf %185, %164 : vector<8x32xf32>
    %195 = arith.addf %193, %194 : vector<8x32xf32>
    %c0_40 = arith.constant 0 : index
    %c160 = arith.constant 160 : index
    %196 = vector.load %arg11[%c0_40, %c160] : memref<8x512xf32, #tpu.memory_space<vmem>>, vector<8x32xf32>
    tpu.vector_store %arg11[%c0_40, %c160], %195 {strides = array<i32>} : memref<8x512xf32, #tpu.memory_space<vmem>>, vector<8x32xf32>,
    %197 = vector.extract_strided_slice %5 {offsets = [48, 0], sizes = [8, 96], strides = [1, 1]} : vector<128x96xf32> to vector<8x96xf32>
    %198 = arith.truncf %195 : vector<8x32xf32> to vector<8x32xbf16>
    %cst_41 = arith.constant dense<0.000000e+00> : vector<8x96xf32>
    %199 = tpu.matmul %198, %6, %cst_41 {dimension_numbers = #tpu.dot_dimension_numbers<[1], [0], [0], [1], [0, 0, 1, 1], [], []>} : vector<8x32xbf16>, vector<32x96xbf16>, vector<8x96xf32> -> vector<8x96xf32>
    %200 = arith.addf %199, %9 : vector<8x96xf32>
    %201 = vector.extract_strided_slice %197 {offsets = [0, 0], sizes = [8, 32], strides = [1, 1]} : vector<8x96xf32> to vector<8x32xf32>
    %202 = vector.extract_strided_slice %200 {offsets = [0, 0], sizes = [8, 32], strides = [1, 1]} : vector<8x96xf32> to vector<8x32xf32>
    %203 = arith.addf %201, %202 : vector<8x32xf32>
    %204 = arith.negf %203 : vector<8x32xf32>
    %205 = math.exp %204 : vector<8x32xf32>
    %cst_42 = arith.constant 1.000000e+00 : f32
    %206 = vector.broadcast %cst_42 : f32 to vector<8x32xf32>
    %207 = arith.addf %206, %205 : vector<8x32xf32>
    %208 = arith.divf %206, %207 : vector<8x32xf32>
    %209 = vector.extract_strided_slice %197 {offsets = [0, 32], sizes = [8, 32], strides = [1, 1]} : vector<8x96xf32> to vector<8x32xf32>
    %210 = vector.extract_strided_slice %200 {offsets = [0, 32], sizes = [8, 32], strides = [1, 1]} : vector<8x96xf32> to vector<8x32xf32>
    %211 = arith.addf %209, %210 : vector<8x32xf32>
    %212 = arith.negf %211 : vector<8x32xf32>
    %213 = math.exp %212 : vector<8x32xf32>
    %cst_43 = arith.constant 1.000000e+00 : f32
    %214 = vector.broadcast %cst_43 : f32 to vector<8x32xf32>
    %215 = arith.addf %214, %213 : vector<8x32xf32>
    %216 = arith.divf %214, %215 : vector<8x32xf32>
    %217 = vector.extract_strided_slice %197 {offsets = [0, 64], sizes = [8, 32], strides = [1, 1]} : vector<8x96xf32> to vector<8x32xf32>
    %218 = vector.extract_strided_slice %200 {offsets = [0, 64], sizes = [8, 32], strides = [1, 1]} : vector<8x96xf32> to vector<8x32xf32>
    %219 = arith.mulf %208, %218 : vector<8x32xf32>
    %220 = arith.addf %217, %219 : vector<8x32xf32>
    %221 = math.tanh %220 : vector<8x32xf32>
    %cst_44 = arith.constant 1.000000e+00 : f32
    %222 = vector.broadcast %cst_44 : f32 to vector<8x32xf32>
    %223 = arith.subf %222, %216 : vector<8x32xf32>
    %224 = arith.mulf %223, %221 : vector<8x32xf32>
    %225 = arith.mulf %216, %195 : vector<8x32xf32>
    %226 = arith.addf %224, %225 : vector<8x32xf32>
    %c0_45 = arith.constant 0 : index
    %c192 = arith.constant 192 : index
    %227 = vector.load %arg11[%c0_45, %c192] : memref<8x512xf32, #tpu.memory_space<vmem>>, vector<8x32xf32>
    tpu.vector_store %arg11[%c0_45, %c192], %226 {strides = array<i32>} : memref<8x512xf32, #tpu.memory_space<vmem>>, vector<8x32xf32>,
    %228 = vector.extract_strided_slice %5 {offsets = [56, 0], sizes = [8, 96], strides = [1, 1]} : vector<128x96xf32> to vector<8x96xf32>
    %229 = arith.truncf %226 : vector<8x32xf32> to vector<8x32xbf16>
    %cst_46 = arith.constant dense<0.000000e+00> : vector<8x96xf32>
    %230 = tpu.matmul %229, %6, %cst_46 {dimension_numbers = #tpu.dot_dimension_numbers<[1], [0], [0], [1], [0, 0, 1, 1], [], []>} : vector<8x32xbf16>, vector<32x96xbf16>, vector<8x96xf32> -> vector<8x96xf32>
    %231 = arith.addf %230, %9 : vector<8x96xf32>
    %232 = vector.extract_strided_slice %228 {offsets = [0, 0], sizes = [8, 32], strides = [1, 1]} : vector<8x96xf32> to vector<8x32xf32>
    %233 = vector.extract_strided_slice %231 {offsets = [0, 0], sizes = [8, 32], strides = [1, 1]} : vector<8x96xf32> to vector<8x32xf32>
    %234 = arith.addf %232, %233 : vector<8x32xf32>
    %235 = arith.negf %234 : vector<8x32xf32>
    %236 = math.exp %235 : vector<8x32xf32>
    %cst_47 = arith.constant 1.000000e+00 : f32
    %237 = vector.broadcast %cst_47 : f32 to vector<8x32xf32>
    %238 = arith.addf %237, %236 : vector<8x32xf32>
    %239 = arith.divf %237, %238 : vector<8x32xf32>
    %240 = vector.extract_strided_slice %228 {offsets = [0, 32], sizes = [8, 32], strides = [1, 1]} : vector<8x96xf32> to vector<8x32xf32>
    %241 = vector.extract_strided_slice %231 {offsets = [0, 32], sizes = [8, 32], strides = [1, 1]} : vector<8x96xf32> to vector<8x32xf32>
    %242 = arith.addf %240, %241 : vector<8x32xf32>
    %243 = arith.negf %242 : vector<8x32xf32>
    %244 = math.exp %243 : vector<8x32xf32>
    %cst_48 = arith.constant 1.000000e+00 : f32
    %245 = vector.broadcast %cst_48 : f32 to vector<8x32xf32>
    %246 = arith.addf %245, %244 : vector<8x32xf32>
    %247 = arith.divf %245, %246 : vector<8x32xf32>
    %248 = vector.extract_strided_slice %228 {offsets = [0, 64], sizes = [8, 32], strides = [1, 1]} : vector<8x96xf32> to vector<8x32xf32>
    %249 = vector.extract_strided_slice %231 {offsets = [0, 64], sizes = [8, 32], strides = [1, 1]} : vector<8x96xf32> to vector<8x32xf32>
    %250 = arith.mulf %239, %249 : vector<8x32xf32>
    %251 = arith.addf %248, %250 : vector<8x32xf32>
    %252 = math.tanh %251 : vector<8x32xf32>
    %cst_49 = arith.constant 1.000000e+00 : f32
    %253 = vector.broadcast %cst_49 : f32 to vector<8x32xf32>
    %254 = arith.subf %253, %247 : vector<8x32xf32>
    %255 = arith.mulf %254, %252 : vector<8x32xf32>
    %256 = arith.mulf %247, %226 : vector<8x32xf32>
    %257 = arith.addf %255, %256 : vector<8x32xf32>
    %c0_50 = arith.constant 0 : index
    %c224 = arith.constant 224 : index
    %258 = vector.load %arg11[%c0_50, %c224] : memref<8x512xf32, #tpu.memory_space<vmem>>, vector<8x32xf32>
    tpu.vector_store %arg11[%c0_50, %c224], %257 {strides = array<i32>} : memref<8x512xf32, #tpu.memory_space<vmem>>, vector<8x32xf32>,
    %259 = vector.extract_strided_slice %5 {offsets = [64, 0], sizes = [8, 96], strides = [1, 1]} : vector<128x96xf32> to vector<8x96xf32>
    %260 = arith.truncf %257 : vector<8x32xf32> to vector<8x32xbf16>
    %cst_51 = arith.constant dense<0.000000e+00> : vector<8x96xf32>
    %261 = tpu.matmul %260, %6, %cst_51 {dimension_numbers = #tpu.dot_dimension_numbers<[1], [0], [0], [1], [0, 0, 1, 1], [], []>} : vector<8x32xbf16>, vector<32x96xbf16>, vector<8x96xf32> -> vector<8x96xf32>
    %262 = arith.addf %261, %9 : vector<8x96xf32>
    %263 = vector.extract_strided_slice %259 {offsets = [0, 0], sizes = [8, 32], strides = [1, 1]} : vector<8x96xf32> to vector<8x32xf32>
    %264 = vector.extract_strided_slice %262 {offsets = [0, 0], sizes = [8, 32], strides = [1, 1]} : vector<8x96xf32> to vector<8x32xf32>
    %265 = arith.addf %263, %264 : vector<8x32xf32>
    %266 = arith.negf %265 : vector<8x32xf32>
    %267 = math.exp %266 : vector<8x32xf32>
    %cst_52 = arith.constant 1.000000e+00 : f32
    %268 = vector.broadcast %cst_52 : f32 to vector<8x32xf32>
    %269 = arith.addf %268, %267 : vector<8x32xf32>
    %270 = arith.divf %268, %269 : vector<8x32xf32>
    %271 = vector.extract_strided_slice %259 {offsets = [0, 32], sizes = [8, 32], strides = [1, 1]} : vector<8x96xf32> to vector<8x32xf32>
    %272 = vector.extract_strided_slice %262 {offsets = [0, 32], sizes = [8, 32], strides = [1, 1]} : vector<8x96xf32> to vector<8x32xf32>
    %273 = arith.addf %271, %272 : vector<8x32xf32>
    %274 = arith.negf %273 : vector<8x32xf32>
    %275 = math.exp %274 : vector<8x32xf32>
    %cst_53 = arith.constant 1.000000e+00 : f32
    %276 = vector.broadcast %cst_53 : f32 to vector<8x32xf32>
    %277 = arith.addf %276, %275 : vector<8x32xf32>
    %278 = arith.divf %276, %277 : vector<8x32xf32>
    %279 = vector.extract_strided_slice %259 {offsets = [0, 64], sizes = [8, 32], strides = [1, 1]} : vector<8x96xf32> to vector<8x32xf32>
    %280 = vector.extract_strided_slice %262 {offsets = [0, 64], sizes = [8, 32], strides = [1, 1]} : vector<8x96xf32> to vector<8x32xf32>
    %281 = arith.mulf %270, %280 : vector<8x32xf32>
    %282 = arith.addf %279, %281 : vector<8x32xf32>
    %283 = math.tanh %282 : vector<8x32xf32>
    %cst_54 = arith.constant 1.000000e+00 : f32
    %284 = vector.broadcast %cst_54 : f32 to vector<8x32xf32>
    %285 = arith.subf %284, %278 : vector<8x32xf32>
    %286 = arith.mulf %285, %283 : vector<8x32xf32>
    %287 = arith.mulf %278, %257 : vector<8x32xf32>
    %288 = arith.addf %286, %287 : vector<8x32xf32>
    %c0_55 = arith.constant 0 : index
    %c256 = arith.constant 256 : index
    %289 = vector.load %arg11[%c0_55, %c256] : memref<8x512xf32, #tpu.memory_space<vmem>>, vector<8x32xf32>
    tpu.vector_store %arg11[%c0_55, %c256], %288 {strides = array<i32>} : memref<8x512xf32, #tpu.memory_space<vmem>>, vector<8x32xf32>,
    %290 = vector.extract_strided_slice %5 {offsets = [72, 0], sizes = [8, 96], strides = [1, 1]} : vector<128x96xf32> to vector<8x96xf32>
    %291 = arith.truncf %288 : vector<8x32xf32> to vector<8x32xbf16>
    %cst_56 = arith.constant dense<0.000000e+00> : vector<8x96xf32>
    %292 = tpu.matmul %291, %6, %cst_56 {dimension_numbers = #tpu.dot_dimension_numbers<[1], [0], [0], [1], [0, 0, 1, 1], [], []>} : vector<8x32xbf16>, vector<32x96xbf16>, vector<8x96xf32> -> vector<8x96xf32>
    %293 = arith.addf %292, %9 : vector<8x96xf32>
    %294 = vector.extract_strided_slice %290 {offsets = [0, 0], sizes = [8, 32], strides = [1, 1]} : vector<8x96xf32> to vector<8x32xf32>
    %295 = vector.extract_strided_slice %293 {offsets = [0, 0], sizes = [8, 32], strides = [1, 1]} : vector<8x96xf32> to vector<8x32xf32>
    %296 = arith.addf %294, %295 : vector<8x32xf32>
    %297 = arith.negf %296 : vector<8x32xf32>
    %298 = math.exp %297 : vector<8x32xf32>
    %cst_57 = arith.constant 1.000000e+00 : f32
    %299 = vector.broadcast %cst_57 : f32 to vector<8x32xf32>
    %300 = arith.addf %299, %298 : vector<8x32xf32>
    %301 = arith.divf %299, %300 : vector<8x32xf32>
    %302 = vector.extract_strided_slice %290 {offsets = [0, 32], sizes = [8, 32], strides = [1, 1]} : vector<8x96xf32> to vector<8x32xf32>
    %303 = vector.extract_strided_slice %293 {offsets = [0, 32], sizes = [8, 32], strides = [1, 1]} : vector<8x96xf32> to vector<8x32xf32>
    %304 = arith.addf %302, %303 : vector<8x32xf32>
    %305 = arith.negf %304 : vector<8x32xf32>
    %306 = math.exp %305 : vector<8x32xf32>
    %cst_58 = arith.constant 1.000000e+00 : f32
    %307 = vector.broadcast %cst_58 : f32 to vector<8x32xf32>
    %308 = arith.addf %307, %306 : vector<8x32xf32>
    %309 = arith.divf %307, %308 : vector<8x32xf32>
    %310 = vector.extract_strided_slice %290 {offsets = [0, 64], sizes = [8, 32], strides = [1, 1]} : vector<8x96xf32> to vector<8x32xf32>
    %311 = vector.extract_strided_slice %293 {offsets = [0, 64], sizes = [8, 32], strides = [1, 1]} : vector<8x96xf32> to vector<8x32xf32>
    %312 = arith.mulf %301, %311 : vector<8x32xf32>
    %313 = arith.addf %310, %312 : vector<8x32xf32>
    %314 = math.tanh %313 : vector<8x32xf32>
    %cst_59 = arith.constant 1.000000e+00 : f32
    %315 = vector.broadcast %cst_59 : f32 to vector<8x32xf32>
    %316 = arith.subf %315, %309 : vector<8x32xf32>
    %317 = arith.mulf %316, %314 : vector<8x32xf32>
    %318 = arith.mulf %309, %288 : vector<8x32xf32>
    %319 = arith.addf %317, %318 : vector<8x32xf32>
    %c0_60 = arith.constant 0 : index
    %c288 = arith.constant 288 : index
    %320 = vector.load %arg11[%c0_60, %c288] : memref<8x512xf32, #tpu.memory_space<vmem>>, vector<8x32xf32>
    tpu.vector_store %arg11[%c0_60, %c288], %319 {strides = array<i32>} : memref<8x512xf32, #tpu.memory_space<vmem>>, vector<8x32xf32>,
    %321 = vector.extract_strided_slice %5 {offsets = [80, 0], sizes = [8, 96], strides = [1, 1]} : vector<128x96xf32> to vector<8x96xf32>
    %322 = arith.truncf %319 : vector<8x32xf32> to vector<8x32xbf16>
    %cst_61 = arith.constant dense<0.000000e+00> : vector<8x96xf32>
    %323 = tpu.matmul %322, %6, %cst_61 {dimension_numbers = #tpu.dot_dimension_numbers<[1], [0], [0], [1], [0, 0, 1, 1], [], []>} : vector<8x32xbf16>, vector<32x96xbf16>, vector<8x96xf32> -> vector<8x96xf32>
    %324 = arith.addf %323, %9 : vector<8x96xf32>
    %325 = vector.extract_strided_slice %321 {offsets = [0, 0], sizes = [8, 32], strides = [1, 1]} : vector<8x96xf32> to vector<8x32xf32>
    %326 = vector.extract_strided_slice %324 {offsets = [0, 0], sizes = [8, 32], strides = [1, 1]} : vector<8x96xf32> to vector<8x32xf32>
    %327 = arith.addf %325, %326 : vector<8x32xf32>
    %328 = arith.negf %327 : vector<8x32xf32>
    %329 = math.exp %328 : vector<8x32xf32>
    %cst_62 = arith.constant 1.000000e+00 : f32
    %330 = vector.broadcast %cst_62 : f32 to vector<8x32xf32>
    %331 = arith.addf %330, %329 : vector<8x32xf32>
    %332 = arith.divf %330, %331 : vector<8x32xf32>
    %333 = vector.extract_strided_slice %321 {offsets = [0, 32], sizes = [8, 32], strides = [1, 1]} : vector<8x96xf32> to vector<8x32xf32>
    %334 = vector.extract_strided_slice %324 {offsets = [0, 32], sizes = [8, 32], strides = [1, 1]} : vector<8x96xf32> to vector<8x32xf32>
    %335 = arith.addf %333, %334 : vector<8x32xf32>
    %336 = arith.negf %335 : vector<8x32xf32>
    %337 = math.exp %336 : vector<8x32xf32>
    %cst_63 = arith.constant 1.000000e+00 : f32
    %338 = vector.broadcast %cst_63 : f32 to vector<8x32xf32>
    %339 = arith.addf %338, %337 : vector<8x32xf32>
    %340 = arith.divf %338, %339 : vector<8x32xf32>
    %341 = vector.extract_strided_slice %321 {offsets = [0, 64], sizes = [8, 32], strides = [1, 1]} : vector<8x96xf32> to vector<8x32xf32>
    %342 = vector.extract_strided_slice %324 {offsets = [0, 64], sizes = [8, 32], strides = [1, 1]} : vector<8x96xf32> to vector<8x32xf32>
    %343 = arith.mulf %332, %342 : vector<8x32xf32>
    %344 = arith.addf %341, %343 : vector<8x32xf32>
    %345 = math.tanh %344 : vector<8x32xf32>
    %cst_64 = arith.constant 1.000000e+00 : f32
    %346 = vector.broadcast %cst_64 : f32 to vector<8x32xf32>
    %347 = arith.subf %346, %340 : vector<8x32xf32>
    %348 = arith.mulf %347, %345 : vector<8x32xf32>
    %349 = arith.mulf %340, %319 : vector<8x32xf32>
    %350 = arith.addf %348, %349 : vector<8x32xf32>
    %c0_65 = arith.constant 0 : index
    %c320 = arith.constant 320 : index
    %351 = vector.load %arg11[%c0_65, %c320] : memref<8x512xf32, #tpu.memory_space<vmem>>, vector<8x32xf32>
    tpu.vector_store %arg11[%c0_65, %c320], %350 {strides = array<i32>} : memref<8x512xf32, #tpu.memory_space<vmem>>, vector<8x32xf32>,
    %352 = vector.extract_strided_slice %5 {offsets = [88, 0], sizes = [8, 96], strides = [1, 1]} : vector<128x96xf32> to vector<8x96xf32>
    %353 = arith.truncf %350 : vector<8x32xf32> to vector<8x32xbf16>
    %cst_66 = arith.constant dense<0.000000e+00> : vector<8x96xf32>
    %354 = tpu.matmul %353, %6, %cst_66 {dimension_numbers = #tpu.dot_dimension_numbers<[1], [0], [0], [1], [0, 0, 1, 1], [], []>} : vector<8x32xbf16>, vector<32x96xbf16>, vector<8x96xf32> -> vector<8x96xf32>
    %355 = arith.addf %354, %9 : vector<8x96xf32>
    %356 = vector.extract_strided_slice %352 {offsets = [0, 0], sizes = [8, 32], strides = [1, 1]} : vector<8x96xf32> to vector<8x32xf32>
    %357 = vector.extract_strided_slice %355 {offsets = [0, 0], sizes = [8, 32], strides = [1, 1]} : vector<8x96xf32> to vector<8x32xf32>
    %358 = arith.addf %356, %357 : vector<8x32xf32>
    %359 = arith.negf %358 : vector<8x32xf32>
    %360 = math.exp %359 : vector<8x32xf32>
    %cst_67 = arith.constant 1.000000e+00 : f32
    %361 = vector.broadcast %cst_67 : f32 to vector<8x32xf32>
    %362 = arith.addf %361, %360 : vector<8x32xf32>
    %363 = arith.divf %361, %362 : vector<8x32xf32>
    %364 = vector.extract_strided_slice %352 {offsets = [0, 32], sizes = [8, 32], strides = [1, 1]} : vector<8x96xf32> to vector<8x32xf32>
    %365 = vector.extract_strided_slice %355 {offsets = [0, 32], sizes = [8, 32], strides = [1, 1]} : vector<8x96xf32> to vector<8x32xf32>
    %366 = arith.addf %364, %365 : vector<8x32xf32>
    %367 = arith.negf %366 : vector<8x32xf32>
    %368 = math.exp %367 : vector<8x32xf32>
    %cst_68 = arith.constant 1.000000e+00 : f32
    %369 = vector.broadcast %cst_68 : f32 to vector<8x32xf32>
    %370 = arith.addf %369, %368 : vector<8x32xf32>
    %371 = arith.divf %369, %370 : vector<8x32xf32>
    %372 = vector.extract_strided_slice %352 {offsets = [0, 64], sizes = [8, 32], strides = [1, 1]} : vector<8x96xf32> to vector<8x32xf32>
    %373 = vector.extract_strided_slice %355 {offsets = [0, 64], sizes = [8, 32], strides = [1, 1]} : vector<8x96xf32> to vector<8x32xf32>
    %374 = arith.mulf %363, %373 : vector<8x32xf32>
    %375 = arith.addf %372, %374 : vector<8x32xf32>
    %376 = math.tanh %375 : vector<8x32xf32>
    %cst_69 = arith.constant 1.000000e+00 : f32
    %377 = vector.broadcast %cst_69 : f32 to vector<8x32xf32>
    %378 = arith.subf %377, %371 : vector<8x32xf32>
    %379 = arith.mulf %378, %376 : vector<8x32xf32>
    %380 = arith.mulf %371, %350 : vector<8x32xf32>
    %381 = arith.addf %379, %380 : vector<8x32xf32>
    %c0_70 = arith.constant 0 : index
    %c352 = arith.constant 352 : index
    %382 = vector.load %arg11[%c0_70, %c352] : memref<8x512xf32, #tpu.memory_space<vmem>>, vector<8x32xf32>
    tpu.vector_store %arg11[%c0_70, %c352], %381 {strides = array<i32>} : memref<8x512xf32, #tpu.memory_space<vmem>>, vector<8x32xf32>,
    %383 = vector.extract_strided_slice %5 {offsets = [96, 0], sizes = [8, 96], strides = [1, 1]} : vector<128x96xf32> to vector<8x96xf32>
    %384 = arith.truncf %381 : vector<8x32xf32> to vector<8x32xbf16>
    %cst_71 = arith.constant dense<0.000000e+00> : vector<8x96xf32>
    %385 = tpu.matmul %384, %6, %cst_71 {dimension_numbers = #tpu.dot_dimension_numbers<[1], [0], [0], [1], [0, 0, 1, 1], [], []>} : vector<8x32xbf16>, vector<32x96xbf16>, vector<8x96xf32> -> vector<8x96xf32>
    %386 = arith.addf %385, %9 : vector<8x96xf32>
    %387 = vector.extract_strided_slice %383 {offsets = [0, 0], sizes = [8, 32], strides = [1, 1]} : vector<8x96xf32> to vector<8x32xf32>
    %388 = vector.extract_strided_slice %386 {offsets = [0, 0], sizes = [8, 32], strides = [1, 1]} : vector<8x96xf32> to vector<8x32xf32>
    %389 = arith.addf %387, %388 : vector<8x32xf32>
    %390 = arith.negf %389 : vector<8x32xf32>
    %391 = math.exp %390 : vector<8x32xf32>
    %cst_72 = arith.constant 1.000000e+00 : f32
    %392 = vector.broadcast %cst_72 : f32 to vector<8x32xf32>
    %393 = arith.addf %392, %391 : vector<8x32xf32>
    %394 = arith.divf %392, %393 : vector<8x32xf32>
    %395 = vector.extract_strided_slice %383 {offsets = [0, 32], sizes = [8, 32], strides = [1, 1]} : vector<8x96xf32> to vector<8x32xf32>
    %396 = vector.extract_strided_slice %386 {offsets = [0, 32], sizes = [8, 32], strides = [1, 1]} : vector<8x96xf32> to vector<8x32xf32>
    %397 = arith.addf %395, %396 : vector<8x32xf32>
    %398 = arith.negf %397 : vector<8x32xf32>
    %399 = math.exp %398 : vector<8x32xf32>
    %cst_73 = arith.constant 1.000000e+00 : f32
    %400 = vector.broadcast %cst_73 : f32 to vector<8x32xf32>
    %401 = arith.addf %400, %399 : vector<8x32xf32>
    %402 = arith.divf %400, %401 : vector<8x32xf32>
    %403 = vector.extract_strided_slice %383 {offsets = [0, 64], sizes = [8, 32], strides = [1, 1]} : vector<8x96xf32> to vector<8x32xf32>
    %404 = vector.extract_strided_slice %386 {offsets = [0, 64], sizes = [8, 32], strides = [1, 1]} : vector<8x96xf32> to vector<8x32xf32>
    %405 = arith.mulf %394, %404 : vector<8x32xf32>
    %406 = arith.addf %403, %405 : vector<8x32xf32>
    %407 = math.tanh %406 : vector<8x32xf32>
    %cst_74 = arith.constant 1.000000e+00 : f32
    %408 = vector.broadcast %cst_74 : f32 to vector<8x32xf32>
    %409 = arith.subf %408, %402 : vector<8x32xf32>
    %410 = arith.mulf %409, %407 : vector<8x32xf32>
    %411 = arith.mulf %402, %381 : vector<8x32xf32>
    %412 = arith.addf %410, %411 : vector<8x32xf32>
    %c0_75 = arith.constant 0 : index
    %c384 = arith.constant 384 : index
    %413 = vector.load %arg11[%c0_75, %c384] : memref<8x512xf32, #tpu.memory_space<vmem>>, vector<8x32xf32>
    tpu.vector_store %arg11[%c0_75, %c384], %412 {strides = array<i32>} : memref<8x512xf32, #tpu.memory_space<vmem>>, vector<8x32xf32>,
    %414 = vector.extract_strided_slice %5 {offsets = [104, 0], sizes = [8, 96], strides = [1, 1]} : vector<128x96xf32> to vector<8x96xf32>
    %415 = arith.truncf %412 : vector<8x32xf32> to vector<8x32xbf16>
    %cst_76 = arith.constant dense<0.000000e+00> : vector<8x96xf32>
    %416 = tpu.matmul %415, %6, %cst_76 {dimension_numbers = #tpu.dot_dimension_numbers<[1], [0], [0], [1], [0, 0, 1, 1], [], []>} : vector<8x32xbf16>, vector<32x96xbf16>, vector<8x96xf32> -> vector<8x96xf32>
    %417 = arith.addf %416, %9 : vector<8x96xf32>
    %418 = vector.extract_strided_slice %414 {offsets = [0, 0], sizes = [8, 32], strides = [1, 1]} : vector<8x96xf32> to vector<8x32xf32>
    %419 = vector.extract_strided_slice %417 {offsets = [0, 0], sizes = [8, 32], strides = [1, 1]} : vector<8x96xf32> to vector<8x32xf32>
    %420 = arith.addf %418, %419 : vector<8x32xf32>
    %421 = arith.negf %420 : vector<8x32xf32>
    %422 = math.exp %421 : vector<8x32xf32>
    %cst_77 = arith.constant 1.000000e+00 : f32
    %423 = vector.broadcast %cst_77 : f32 to vector<8x32xf32>
    %424 = arith.addf %423, %422 : vector<8x32xf32>
    %425 = arith.divf %423, %424 : vector<8x32xf32>
    %426 = vector.extract_strided_slice %414 {offsets = [0, 32], sizes = [8, 32], strides = [1, 1]} : vector<8x96xf32> to vector<8x32xf32>
    %427 = vector.extract_strided_slice %417 {offsets = [0, 32], sizes = [8, 32], strides = [1, 1]} : vector<8x96xf32> to vector<8x32xf32>
    %428 = arith.addf %426, %427 : vector<8x32xf32>
    %429 = arith.negf %428 : vector<8x32xf32>
    %430 = math.exp %429 : vector<8x32xf32>
    %cst_78 = arith.constant 1.000000e+00 : f32
    %431 = vector.broadcast %cst_78 : f32 to vector<8x32xf32>
    %432 = arith.addf %431, %430 : vector<8x32xf32>
    %433 = arith.divf %431, %432 : vector<8x32xf32>
    %434 = vector.extract_strided_slice %414 {offsets = [0, 64], sizes = [8, 32], strides = [1, 1]} : vector<8x96xf32> to vector<8x32xf32>
    %435 = vector.extract_strided_slice %417 {offsets = [0, 64], sizes = [8, 32], strides = [1, 1]} : vector<8x96xf32> to vector<8x32xf32>
    %436 = arith.mulf %425, %435 : vector<8x32xf32>
    %437 = arith.addf %434, %436 : vector<8x32xf32>
    %438 = math.tanh %437 : vector<8x32xf32>
    %cst_79 = arith.constant 1.000000e+00 : f32
    %439 = vector.broadcast %cst_79 : f32 to vector<8x32xf32>
    %440 = arith.subf %439, %433 : vector<8x32xf32>
    %441 = arith.mulf %440, %438 : vector<8x32xf32>
    %442 = arith.mulf %433, %412 : vector<8x32xf32>
    %443 = arith.addf %441, %442 : vector<8x32xf32>
    %c0_80 = arith.constant 0 : index
    %c416 = arith.constant 416 : index
    %444 = vector.load %arg11[%c0_80, %c416] : memref<8x512xf32, #tpu.memory_space<vmem>>, vector<8x32xf32>
    tpu.vector_store %arg11[%c0_80, %c416], %443 {strides = array<i32>} : memref<8x512xf32, #tpu.memory_space<vmem>>, vector<8x32xf32>,
    %445 = vector.extract_strided_slice %5 {offsets = [112, 0], sizes = [8, 96], strides = [1, 1]} : vector<128x96xf32> to vector<8x96xf32>
    %446 = arith.truncf %443 : vector<8x32xf32> to vector<8x32xbf16>
    %cst_81 = arith.constant dense<0.000000e+00> : vector<8x96xf32>
    %447 = tpu.matmul %446, %6, %cst_81 {dimension_numbers = #tpu.dot_dimension_numbers<[1], [0], [0], [1], [0, 0, 1, 1], [], []>} : vector<8x32xbf16>, vector<32x96xbf16>, vector<8x96xf32> -> vector<8x96xf32>
    %448 = arith.addf %447, %9 : vector<8x96xf32>
    %449 = vector.extract_strided_slice %445 {offsets = [0, 0], sizes = [8, 32], strides = [1, 1]} : vector<8x96xf32> to vector<8x32xf32>
    %450 = vector.extract_strided_slice %448 {offsets = [0, 0], sizes = [8, 32], strides = [1, 1]} : vector<8x96xf32> to vector<8x32xf32>
    %451 = arith.addf %449, %450 : vector<8x32xf32>
    %452 = arith.negf %451 : vector<8x32xf32>
    %453 = math.exp %452 : vector<8x32xf32>
    %cst_82 = arith.constant 1.000000e+00 : f32
    %454 = vector.broadcast %cst_82 : f32 to vector<8x32xf32>
    %455 = arith.addf %454, %453 : vector<8x32xf32>
    %456 = arith.divf %454, %455 : vector<8x32xf32>
    %457 = vector.extract_strided_slice %445 {offsets = [0, 32], sizes = [8, 32], strides = [1, 1]} : vector<8x96xf32> to vector<8x32xf32>
    %458 = vector.extract_strided_slice %448 {offsets = [0, 32], sizes = [8, 32], strides = [1, 1]} : vector<8x96xf32> to vector<8x32xf32>
    %459 = arith.addf %457, %458 : vector<8x32xf32>
    %460 = arith.negf %459 : vector<8x32xf32>
    %461 = math.exp %460 : vector<8x32xf32>
    %cst_83 = arith.constant 1.000000e+00 : f32
    %462 = vector.broadcast %cst_83 : f32 to vector<8x32xf32>
    %463 = arith.addf %462, %461 : vector<8x32xf32>
    %464 = arith.divf %462, %463 : vector<8x32xf32>
    %465 = vector.extract_strided_slice %445 {offsets = [0, 64], sizes = [8, 32], strides = [1, 1]} : vector<8x96xf32> to vector<8x32xf32>
    %466 = vector.extract_strided_slice %448 {offsets = [0, 64], sizes = [8, 32], strides = [1, 1]} : vector<8x96xf32> to vector<8x32xf32>
    %467 = arith.mulf %456, %466 : vector<8x32xf32>
    %468 = arith.addf %465, %467 : vector<8x32xf32>
    %469 = math.tanh %468 : vector<8x32xf32>
    %cst_84 = arith.constant 1.000000e+00 : f32
    %470 = vector.broadcast %cst_84 : f32 to vector<8x32xf32>
    %471 = arith.subf %470, %464 : vector<8x32xf32>
    %472 = arith.mulf %471, %469 : vector<8x32xf32>
    %473 = arith.mulf %464, %443 : vector<8x32xf32>
    %474 = arith.addf %472, %473 : vector<8x32xf32>
    %c0_85 = arith.constant 0 : index
    %c448 = arith.constant 448 : index
    %475 = vector.load %arg11[%c0_85, %c448] : memref<8x512xf32, #tpu.memory_space<vmem>>, vector<8x32xf32>
    tpu.vector_store %arg11[%c0_85, %c448], %474 {strides = array<i32>} : memref<8x512xf32, #tpu.memory_space<vmem>>, vector<8x32xf32>,
    %476 = vector.extract_strided_slice %5 {offsets = [120, 0], sizes = [8, 96], strides = [1, 1]} : vector<128x96xf32> to vector<8x96xf32>
    %477 = arith.truncf %474 : vector<8x32xf32> to vector<8x32xbf16>
    %cst_86 = arith.constant dense<0.000000e+00> : vector<8x96xf32>
    %478 = tpu.matmul %477, %6, %cst_86 {dimension_numbers = #tpu.dot_dimension_numbers<[1], [0], [0], [1], [0, 0, 1, 1], [], []>} : vector<8x32xbf16>, vector<32x96xbf16>, vector<8x96xf32> -> vector<8x96xf32>
    %479 = arith.addf %478, %9 : vector<8x96xf32>
    %480 = vector.extract_strided_slice %476 {offsets = [0, 0], sizes = [8, 32], strides = [1, 1]} : vector<8x96xf32> to vector<8x32xf32>
    %481 = vector.extract_strided_slice %479 {offsets = [0, 0], sizes = [8, 32], strides = [1, 1]} : vector<8x96xf32> to vector<8x32xf32>
    %482 = arith.addf %480, %481 : vector<8x32xf32>
    %483 = arith.negf %482 : vector<8x32xf32>
    %484 = math.exp %483 : vector<8x32xf32>
    %cst_87 = arith.constant 1.000000e+00 : f32
    %485 = vector.broadcast %cst_87 : f32 to vector<8x32xf32>
    %486 = arith.addf %485, %484 : vector<8x32xf32>
    %487 = arith.divf %485, %486 : vector<8x32xf32>
    %488 = vector.extract_strided_slice %476 {offsets = [0, 32], sizes = [8, 32], strides = [1, 1]} : vector<8x96xf32> to vector<8x32xf32>
    %489 = vector.extract_strided_slice %479 {offsets = [0, 32], sizes = [8, 32], strides = [1, 1]} : vector<8x96xf32> to vector<8x32xf32>
    %490 = arith.addf %488, %489 : vector<8x32xf32>
    %491 = arith.negf %490 : vector<8x32xf32>
    %492 = math.exp %491 : vector<8x32xf32>
    %cst_88 = arith.constant 1.000000e+00 : f32
    %493 = vector.broadcast %cst_88 : f32 to vector<8x32xf32>
    %494 = arith.addf %493, %492 : vector<8x32xf32>
    %495 = arith.divf %493, %494 : vector<8x32xf32>
    %496 = vector.extract_strided_slice %476 {offsets = [0, 64], sizes = [8, 32], strides = [1, 1]} : vector<8x96xf32> to vector<8x32xf32>
    %497 = vector.extract_strided_slice %479 {offsets = [0, 64], sizes = [8, 32], strides = [1, 1]} : vector<8x96xf32> to vector<8x32xf32>
    %498 = arith.mulf %487, %497 : vector<8x32xf32>
    %499 = arith.addf %496, %498 : vector<8x32xf32>
    %500 = math.tanh %499 : vector<8x32xf32>
    %cst_89 = arith.constant 1.000000e+00 : f32
    %501 = vector.broadcast %cst_89 : f32 to vector<8x32xf32>
    %502 = arith.subf %501, %495 : vector<8x32xf32>
    %503 = arith.mulf %502, %500 : vector<8x32xf32>
    %504 = arith.mulf %495, %474 : vector<8x32xf32>
    %505 = arith.addf %503, %504 : vector<8x32xf32>
    %c0_90 = arith.constant 0 : index
    %c480 = arith.constant 480 : index
    %506 = vector.load %arg11[%c0_90, %c480] : memref<8x512xf32, #tpu.memory_space<vmem>>, vector<8x32xf32>
    tpu.vector_store %arg11[%c0_90, %c480], %505 {strides = array<i32>} : memref<8x512xf32, #tpu.memory_space<vmem>>, vector<8x32xf32>,
    %c0_91 = arith.constant 0 : index
    %c0_92 = arith.constant 0 : index
    %c0_93 = arith.constant 0 : index
    %507 = vector.load %arg7[%c0_91, %c0_92, %c0_93] : memref<16x1x128xf32, #tpu.memory_space<vmem>>, vector<16x1x128xf32>
    %c0_94 = arith.constant 0 : index
    %c0_95 = arith.constant 0 : index
    %c0_96 = arith.constant 0 : index
    %508 = vector.load %arg5[%c0_94, %c0_95, %c0_96] : memref<1x16x128xf32, #tpu.memory_space<vmem>>, vector<1x16x128xf32>
    %509 = vector.broadcast %507 : vector<16x1x128xf32> to vector<16x16x128xf32>
    %510 = vector.broadcast %508 : vector<1x16x128xf32> to vector<16x16x128xf32>
    %511 = arith.mulf %509, %510 : vector<16x16x128xf32>
    %c0_97 = arith.constant 0 : index
    %c0_98 = arith.constant 0 : index
    %c0_99 = arith.constant 0 : index
    %512 = vector.load %arg8[%c0_97, %c0_98, %c0_99] : memref<16x1x128xf32, #tpu.memory_space<vmem>>, vector<16x1x128xf32>
    %c0_100 = arith.constant 0 : index
    %c0_101 = arith.constant 0 : index
    %c0_102 = arith.constant 0 : index
    %513 = vector.load %arg6[%c0_100, %c0_101, %c0_102] : memref<1x16x128xf32, #tpu.memory_space<vmem>>, vector<1x16x128xf32>
    %514 = vector.broadcast %512 : vector<16x1x128xf32> to vector<16x16x128xf32>
    %515 = vector.broadcast %513 : vector<1x16x128xf32> to vector<16x16x128xf32>
    %516 = arith.mulf %514, %515 : vector<16x16x128xf32>
    %517 = tpu.concatenate %511, %516 in 1 : vector<16x16x128xf32>, vector<16x16x128xf32> -> vector<16x32x128xf32>
    %518 = vector.shape_cast %517 : vector<16x32x128xf32> to vector<512x128xf32>
    %c0_103 = arith.constant 0 : index
    %c0_104 = arith.constant 0 : index
    %519 = vector.load %arg11[%c0_103, %c0_104] : memref<8x512xf32, #tpu.memory_space<vmem>>, vector<8x512xf32>
    %cst_105 = arith.constant dense<0.000000e+00> : vector<8x128xf32>
    %520 = tpu.matmul %519, %518, %cst_105 {dimension_numbers = #tpu.dot_dimension_numbers<[1], [0], [0], [1], [0, 0, 1, 1], [], []>} : vector<8x512xf32>, vector<512x128xf32>, vector<8x128xf32> -> vector<8x128xf32>
    %c0_106 = arith.constant 0 : index
    %c0_107 = arith.constant 0 : index
    %521 = vector.load %arg9[%c0_106, %c0_107] : memref<1x128xf32, #tpu.memory_space<vmem>>, vector<1x128xf32>
    %522 = vector.broadcast %521 : vector<1x128xf32> to vector<8x128xf32>
    %523 = arith.addf %520, %522 : vector<8x128xf32>
    %524 = vector.extract_strided_slice %523 {offsets = [0, 0], sizes = [2, 128], strides = [1, 1]} : vector<8x128xf32> to vector<2x128xf32>
    %c0_108 = arith.constant 0 : index
    %c0_109 = arith.constant 0 : index
    %525 = vector.load %arg10[%c0_108, %c0_109] : memref<2x128xf32, #tpu.memory_space<vmem>>, vector<2x128xf32>
    tpu.vector_store %arg10[%c0_108, %c0_109], %524 {strides = array<i32>} : memref<2x128xf32, #tpu.memory_space<vmem>>, vector<2x128xf32>,
    return
  }
}

</mosaic_0001>

<llo_original>
// kernel: temporal_block.1
$region0: #{temporal_block.1}
  #allocation0 [shape = 'u32[]', space=smem, size = 0x4, offset = 0x4, fixed_abs, tag = 'smem constant byte address 0x4 - core index']
  #allocation1 [shape = 'u32[144,128]{1,0:T(1,128)}', space=vmem, size = 0x12000, scoped, tag = 'internal scratch']
  #allocation2 [shape = 'f32[8,512]{1,0:T(8,128)}', space=vmem, size = 0x4000, scoped, tag = 'scratch operand']
  %s0 = inlined_call_operand.vmem [shape: f32[128,16], index: 0, kind: input, shape index: {}]
  %s1 = inlined_call_operand.vmem [shape: f32[16,96], index: 1, kind: input, shape index: {}]
  %s2 = inlined_call_operand.vmem [shape: f32[1,96], index: 2, kind: input, shape index: {}]
  %s3 = inlined_call_operand.vmem [shape: bf16[32,96], index: 3, kind: input, shape index: {}]
  %s4 = inlined_call_operand.vmem [shape: f32[1,96], index: 4, kind: input, shape index: {}]
  %s5 = inlined_call_operand.vmem [shape: f32[1,16,128], index: 5, kind: input, shape index: {}]
  %s6 = inlined_call_operand.vmem [shape: f32[1,16,128], index: 6, kind: input, shape index: {}]
  %s7 = inlined_call_operand.vmem [shape: f32[16,1,128], index: 7, kind: input, shape index: {}]
  %s8 = inlined_call_operand.vmem [shape: f32[16,1,128], index: 8, kind: input, shape index: {}]
  %s9 = inlined_call_operand.vmem [shape: f32[1,128], index: 9, kind: input, shape index: {}]
  %s10 = inlined_call_operand.hbm [shape: f32[2,128], index: 10, kind: output, shape index: {}]
  %s11 = sld [smem:[#allocation0]]
  $region50: #{temporal_block.1} parent=0
    _
  %s13 = ssub.s32 1, %s11
  %s14 = scalar_select 0, %s13, %s11
  $region1: #{temporal_block.1} parent=0
    #allocation3 [shape = 'u8[1024]{0}', space=vmem, size = 0x400, scoped, tag = 'output window, operand 0, single buffered']
    #allocation4 [shape = 's32[1]{0}', space=sflag, size = 0x4, scoped, tag = 'scoped memory for temporal_block.1']
    %15 = vsyncpa [#allocation4], 0
    // Predicated region
    $region2: #{temporal_block.1} parent=1 // pred_check
      _
    $region3: #{temporal_block.1} parent=1 // pred_check_branch
      %17 = sbr.rel (0) target = $region5
    $region4: #{temporal_block.1} parent=1 // pred_region
      _
    $region5: #{temporal_block.1} parent=1 // pred_fallthru
      _
    // Predicated region
    $region6: #{temporal_block.1} parent=1 // pred_check
      _
    $region7: #{temporal_block.1} parent=1 // pred_check_branch
      %19 = sbr.rel (0) target = $region9
    $region8: #{temporal_block.1} parent=1 // pred_region
      _
    $region9: #{temporal_block.1} parent=1 // pred_fallthru
      _
    // Predicated region
    $region10: #{temporal_block.1} parent=1 // pred_check
      _
    $region11: #{temporal_block.1} parent=1 // pred_check_branch
      %21 = sbr.rel (0) target = $region13
    $region12: #{temporal_block.1} parent=1 // pred_region
      _
    $region13: #{temporal_block.1} parent=1 // pred_fallthru
      _
    // Predicated region
    $region14: #{temporal_block.1} parent=1 // pred_check
      _
    $region15: #{temporal_block.1} parent=1 // pred_check_branch
      %23 = sbr.rel (0) target = $region17
    $region16: #{temporal_block.1} parent=1 // pred_region
      _
    $region17: #{temporal_block.1} parent=1 // pred_fallthru
      _
    // Predicated region
    $region18: #{temporal_block.1} parent=1 // pred_check
      _
    $region19: #{temporal_block.1} parent=1 // pred_check_branch
      %25 = sbr.rel (0) target = $region21
    $region20: #{temporal_block.1} parent=1 // pred_region
      _
    $region21: #{temporal_block.1} parent=1 // pred_fallthru
      _
    // Predicated region
    $region22: #{temporal_block.1} parent=1 // pred_check
      _
    $region23: #{temporal_block.1} parent=1 // pred_check_branch
      %27 = sbr.rel (0) target = $region25
    $region24: #{temporal_block.1} parent=1 // pred_region
      _
    $region25: #{temporal_block.1} parent=1 // pred_fallthru
      _
    // Predicated region
    $region26: #{temporal_block.1} parent=1 // pred_check
      _
    $region27: #{temporal_block.1} parent=1 // pred_check_branch
      %29 = sbr.rel (0) target = $region29
    $region28: #{temporal_block.1} parent=1 // pred_region
      _
    $region29: #{temporal_block.1} parent=1 // pred_fallthru
      _
    // Predicated region
    $region30: #{temporal_block.1} parent=1 // pred_check
      _
    $region31: #{temporal_block.1} parent=1 // pred_check_branch
      %31 = sbr.rel (0) target = $region33
    $region32: #{temporal_block.1} parent=1 // pred_region
      _
    $region33: #{temporal_block.1} parent=1 // pred_fallthru
      _
    // Predicated region
    $region34: #{temporal_block.1} parent=1 // pred_check
      _
    $region35: #{temporal_block.1} parent=1 // pred_check_branch
      %33 = sbr.rel (0) target = $region37
    $region36: #{temporal_block.1} parent=1 // pred_region
      _
    $region37: #{temporal_block.1} parent=1 // pred_fallthru
      _
    // Predicated region
    $region38: #{temporal_block.1} parent=1 // pred_check
      _
    $region39: #{temporal_block.1} parent=1 // pred_check_branch
      %35 = sbr.rel (0) target = $region41
    $region40: #{temporal_block.1} parent=1 // pred_region
      _
    $region41: #{temporal_block.1} parent=1 // pred_fallthru
      _
    %v37 = vld [vmem:[%s0] sm:$0xff]
    %v38 = vld [vmem:[%s0 + $0x8] sm:$0xff]
    %v39 = vld [vmem:[%s0 + $0x10] sm:$0xff]
    %v40 = vld [vmem:[%s0 + $0x18] sm:$0xff]
    %v41 = vld [vmem:[%s0 + $0x20] sm:$0xff]
    %v42 = vld [vmem:[%s0 + $0x28] sm:$0xff]
    %v43 = vld [vmem:[%s0 + $0x30] sm:$0xff]
    %v44 = vld [vmem:[%s0 + $0x38] sm:$0xff]
    %v45 = vld [vmem:[%s0 + $0x40] sm:$0xff]
    %v46 = vld [vmem:[%s0 + $0x48] sm:$0xff]
    %v47 = vld [vmem:[%s0 + $0x50] sm:$0xff]
    %v48 = vld [vmem:[%s0 + $0x58] sm:$0xff]
    %v49 = vld [vmem:[%s0 + $0x60] sm:$0xff]
    %v50 = vld [vmem:[%s0 + $0x68] sm:$0xff]
    %v51 = vld [vmem:[%s0 + $0x70] sm:$0xff]
    %v52 = vld [vmem:[%s0 + $0x78] sm:$0xff]
    %v53 = vld [vmem:[%s1] sm:$0xff]
    %v54 = vld [vmem:[%s1 + $0x8] sm:$0xff]
    %v55 = vld [vmem:[%s2] sm:$0x1]
    %v57 = vlaneseq
    %v58 = vshrl.u32 %v57, 7
    %v59 = vsub.s32 0, %v58
    %v60 = vrot.slane %v55, %v59
    %vm62 = vcmask 130048
    %v64 = vsel %vm62, %v37, 0
    %v67 = vsel %vm62, %v38, 0
    %v70 = vsel %vm62, %v39, 0
    %v73 = vsel %vm62, %v40, 0
    %v76 = vsel %vm62, %v41, 0
    %v79 = vsel %vm62, %v42, 0
    %v82 = vsel %vm62, %v43, 0
    %v85 = vsel %vm62, %v44, 0
    %v88 = vsel %vm62, %v45, 0
    %v91 = vsel %vm62, %v46, 0
    %v94 = vsel %vm62, %v47, 0
    %v97 = vsel %vm62, %v48, 0
    %v100 = vsel %vm62, %v49, 0
    %v103 = vsel %vm62, %v50, 0
    %v106 = vsel %vm62, %v51, 0
    %v109 = vsel %vm62, %v52, 0
    %111 = vmatprep.subr.mxu0 0.0
    %112 = vmatpush1.msra.mxu0 0.0
    %113 = vmatprep.subr.mxu0 0.0
    %114 = vmatpush1.msra.mxu0 0.0
    %115 = vmatprep.subr.mxu0 0.0
    %116 = vmatpush1.msra.mxu0 0.0
    %117 = vmatprep.subr.mxu0 0.0
    %118 = vmatpush1.msra.mxu0 0.0
    %119 = vmatprep.subr.mxu0 0.0
    %120 = vmatpush1.msra.mxu0 0.0
    %121 = vmatprep.subr.mxu0 0.0
    %122 = vmatpush1.msra.mxu0 0.0
    %123 = vmatprep.subr.mxu0 0.0
    %124 = vmatpush1.msra.mxu0 0.0
    %125 = vmatprep.subr.mxu0 0.0
    %126 = vmatpush1.msra.mxu0 0.0
    %127 = vmatprep.subr.mxu0 0.0
    %128 = vmatpush1.msra.mxu0 0.0
    %129 = vmatprep.subr.mxu0 0.0
    %130 = vmatpush1.msra.mxu0 0.0
    %131 = vmatprep.subr.mxu0 0.0
    %132 = vmatpush1.msra.mxu0 0.0
    %133 = vmatprep.subr.mxu0 0.0
    %134 = vmatpush1.msra.mxu0 0.0
    %135 = vmatprep.subr.mxu0 0.0
    %136 = vmatpush1.msra.mxu0 0.0
    %137 = vmatprep.subr.mxu0 0.0
    %138 = vmatpush1.msra.mxu0 0.0
    %139 = vmatprep.subr.mxu0 0.0
    %140 = vmatpush1.msra.mxu0 %v54
    %141 = vmatprep.subr.mxu0 0.0
    %142 = vmatpush1.msra.mxu0 %v53
    %143 = vmatprep.subr.mxu0 0.0
    %144 = vmatpush2.msra.mxu0 0.0
    %145 = vmatprep.subr.mxu0 0.0
    %146 = vmatpush2.msra.mxu0 0.0
    %147 = vmatprep.subr.mxu0 0.0
    %148 = vmatpush2.msra.mxu0 0.0
    %149 = vmatprep.subr.mxu0 0.0
    %150 = vmatpush2.msra.mxu0 0.0
    %151 = vmatprep.subr.mxu0 0.0
    %152 = vmatpush2.msra.mxu0 0.0
    %153 = vmatprep.subr.mxu0 0.0
    %154 = vmatpush2.msra.mxu0 0.0
    %155 = vmatprep.subr.mxu0 0.0
    %156 = vmatpush2.msra.mxu0 0.0
    %157 = vmatprep.subr.mxu0 0.0
    %158 = vmatpush2.msra.mxu0 0.0
    %159 = vmatprep.subr.mxu0 0.0
    %160 = vmatpush2.msra.mxu0 0.0
    %161 = vmatprep.subr.mxu0 0.0
    %162 = vmatpush2.msra.mxu0 0.0
    %163 = vmatprep.subr.mxu0 0.0
    %164 = vmatpush2.msra.mxu0 0.0
    %165 = vmatprep.subr.mxu0 0.0
    %166 = vmatpush2.msra.mxu0 0.0
    %167 = vmatprep.subr.mxu0 0.0
    %168 = vmatpush2.msra.mxu0 0.0
    %169 = vmatprep.subr.mxu0 0.0
    %170 = vmatpush2.msra.mxu0 0.0
    %171 = vmatprep.subr.mxu0 0.0
    %172 = vmatpush2.msra.mxu0 0.0
    %173 = vmatprep.subr.mxu0 0.0
    %174 = vmatpush2.msra.mxu0 0.0
    %175 = vmatprep.mubr.f32.mxu0 0.0
    %176 = vmatmul.mubr.f32.gmra.mxu0 %v64
    %v177 = vpop.f32.mrf.mxu0
    %v178 = vadd.f32 %v60, %v177
    %v179 = vpop.f32.mrf.mxu0
    %180 = vmatprep.mubr.f32.mxu0 0.0
    %181 = vmatmul.mubr.f32.gmra.mxu0 %v67
    %v182 = vpop.f32.mrf.mxu0
    %v183 = vadd.f32 %v60, %v182
    %v184 = vpop.f32.mrf.mxu0
    %185 = vmatprep.mubr.f32.mxu0 0.0
    %186 = vmatmul.mubr.f32.gmra.mxu0 %v70
    %v187 = vpop.f32.mrf.mxu0
    %v188 = vadd.f32 %v60, %v187
    %v189 = vpop.f32.mrf.mxu0
    %190 = vmatprep.mubr.f32.mxu0 0.0
    %191 = vmatmul.mubr.f32.gmra.mxu0 %v73
    %v192 = vpop.f32.mrf.mxu0
    %v193 = vadd.f32 %v60, %v192
    %v194 = vpop.f32.mrf.mxu0
    %195 = vmatprep.mubr.f32.mxu0 0.0
    %196 = vmatmul.mubr.f32.gmra.mxu0 %v76
    %v197 = vpop.f32.mrf.mxu0
    %v198 = vadd.f32 %v60, %v197
    %v199 = vpop.f32.mrf.mxu0
    %200 = vmatprep.mubr.f32.mxu0 0.0
    %201 = vmatmul.mubr.f32.gmra.mxu0 %v79
    %v202 = vpop.f32.mrf.mxu0
    %v203 = vadd.f32 %v60, %v202
    %v204 = vpop.f32.mrf.mxu0
    %205 = vmatprep.mubr.f32.mxu0 0.0
    %206 = vmatmul.mubr.f32.gmra.mxu0 %v82
    %v207 = vpop.f32.mrf.mxu0
    %v208 = vadd.f32 %v60, %v207
    %v209 = vpop.f32.mrf.mxu0
    %210 = vmatprep.mubr.f32.mxu0 0.0
    %211 = vmatmul.mubr.f32.gmra.mxu0 %v85
    %v212 = vpop.f32.mrf.mxu0
    %v213 = vadd.f32 %v60, %v212
    %v214 = vpop.f32.mrf.mxu0
    %215 = vmatprep.mubr.f32.mxu0 0.0
    %216 = vmatmul.mubr.f32.gmra.mxu0 %v88
    %v217 = vpop.f32.mrf.mxu0
    %v218 = vadd.f32 %v60, %v217
    %v219 = vpop.f32.mrf.mxu0
    %220 = vmatprep.mubr.f32.mxu0 0.0
    %221 = vmatmul.mubr.f32.gmra.mxu0 %v91
    %v222 = vpop.f32.mrf.mxu0
    %v223 = vadd.f32 %v60, %v222
    %v224 = vpop.f32.mrf.mxu0
    %225 = vmatprep.mubr.f32.mxu0 0.0
    %226 = vmatmul.mubr.f32.gmra.mxu0 %v94
    %v227 = vpop.f32.mrf.mxu0
    %v228 = vadd.f32 %v60, %v227
    %v229 = vpop.f32.mrf.mxu0
    %230 = vmatprep.mubr.f32.mxu0 0.0
    %231 = vmatmul.mubr.f32.gmra.mxu0 %v97
    %v232 = vpop.f32.mrf.mxu0
    %v233 = vadd.f32 %v60, %v232
    %v234 = vpop.f32.mrf.mxu0
    %235 = vmatprep.mubr.f32.mxu0 0.0
    %236 = vmatmul.mubr.f32.gmra.mxu0 %v100
    %v237 = vpop.f32.mrf.mxu0
    %v238 = vadd.f32 %v60, %v237
    %v239 = vpop.f32.mrf.mxu0
    %240 = vmatprep.mubr.f32.mxu0 0.0
    %241 = vmatmul.mubr.f32.gmra.mxu0 %v103
    %v242 = vpop.f32.mrf.mxu0
    %v243 = vadd.f32 %v60, %v242
    %v244 = vpop.f32.mrf.mxu0
    %245 = vmatprep.mubr.f32.mxu0 0.0
    %246 = vmatmul.mubr.f32.gmra.mxu0 %v106
    %v247 = vpop.f32.mrf.mxu0
    %v248 = vadd.f32 %v60, %v247
    %v249 = vpop.f32.mrf.mxu0
    %250 = vmatprep.mubr.f32.mxu0 0.0
    %251 = vmatmul.mubr.f32.gmra.mxu0 %v109
    %v252 = vpop.f32.mrf.mxu0
    %v253 = vadd.f32 %v60, %v252
    %v254 = vpop.f32.mrf.mxu0
    %255 = vdwg.mxu0
    %v256 = vld [vmem:[%s3] sm:$0xf]
    %v257 = vld [vmem:[%s3 + $0x4] sm:$0xf]
    %v258 = vld [vmem:[%s3 + $0x8] sm:$0xf]
    %v259 = vld [vmem:[%s3 + $0xc] sm:$0xf]
    %v260 = vld [vmem:[%s4] sm:$0x1]
    %v262 = vlaneseq
    %v263 = vshrl.u32 %v262, 7
    %v264 = vsub.s32 0, %v263
    %v265 = vrot.slane %v260, %v264
    %v271 = vunpack.c.l.b16 %v256
    %v272 = vunpack.c.l.b16 %v257
    %v273 = vunpack.c.l.b16 %v258
    %v274 = vunpack.c.l.b16 %v259
    %v275 = vpack.c.b16 %v272, %v271
    %v276 = vpack.c.b16 %v274, %v273
    %vm279 = vcmask 261120
    %v281 = vsel %vm279, 0, 0
    %283 = vmatprep.subr.bf16.mxu0 0
    %284 = vmatpush1.bf16.msra.mxu0 0
    %285 = vmatprep.subr.bf16.mxu0 0
    %286 = vmatpush1.bf16.msra.mxu0 0
    %287 = vmatprep.subr.bf16.mxu0 0
    %288 = vmatpush1.bf16.msra.mxu0 0
    %289 = vmatprep.subr.bf16.mxu0 0
    %290 = vmatpush1.bf16.msra.mxu0 0
    %291 = vmatprep.subr.bf16.mxu0 0
    %292 = vmatpush1.bf16.msra.mxu0 0
    %293 = vmatprep.subr.bf16.mxu0 0
    %294 = vmatpush1.bf16.msra.mxu0 0
    %295 = vmatprep.subr.bf16.mxu0 0
    %296 = vmatpush1.bf16.msra.mxu0 %v276
    %297 = vmatprep.subr.bf16.mxu0 0
    %298 = vmatpush1.bf16.msra.mxu0 %v275
    %299 = vmatprep.subr.bf16.mxu0 0
    %300 = vmatpush2.bf16.msra.mxu0 0
    %301 = vmatprep.subr.bf16.mxu0 0
    %302 = vmatpush2.bf16.msra.mxu0 0
    %303 = vmatprep.subr.bf16.mxu0 0
    %304 = vmatpush2.bf16.msra.mxu0 0
    %305 = vmatprep.subr.bf16.mxu0 0
    %306 = vmatpush2.bf16.msra.mxu0 0
    %307 = vmatprep.subr.bf16.mxu0 0
    %308 = vmatpush2.bf16.msra.mxu0 0
    %309 = vmatprep.subr.bf16.mxu0 0
    %310 = vmatpush2.bf16.msra.mxu0 0
    %311 = vmatprep.subr.bf16.mxu0 0
    %312 = vmatpush2.bf16.msra.mxu0 0
    %313 = vmatprep.subr.bf16.mxu0 0
    %314 = vmatpush2.bf16.msra.mxu0 0
    %315 = vmatprep.mubr.bf16.mxu0 0
    %316 = vmatmul.mubr.bf16.gmra.mxu0 %v281
    %v317 = vpop.f32.mrf.mxu0
    %v318 = vadd.f32 %v265, %v317
    %v319 = vpop.f32.mrf.mxu0
    %v320 = vpop.f32.mrf.mxu0
    %v321 = vpop.f32.mrf.mxu0
    %322 = vdwg.mxu0
    %v323 = vadd.f32 %v178, %v318
    %v324 = vxor.u32 %v323, 2147483648
    %v325 = vmul.f32 %v324, 1.442695
    %v326 = vpow.pop %v325
    %v327 = vadd.f32 %v326, 1.0
    %v328 = vrcp.pop %v327
    %v329 = vmul.f32 1.0, %v328
    %331 = vrot.lane.b32.xlu0 %v318, 64
    %v332 = vpop.permute.xlu0 %331
    %v334 = vmul.f32 %v329, %v332
    %336 = vrot.lane.b32.xlu0 %v334, 64
    %v337 = vpop.permute.xlu0 %336
    %v339 = vadd.f32 %v178, %v337
    %v340 = vtanh.pop %v339
    %v341 = vsub.f32 1.0, %v329
    %343 = vrot.lane.b32.xlu0 %v340, 96
    %v344 = vpop.permute.xlu0 %343
    %v346 = vmul.f32 %v341, %v344
    %v347 = vmul.f32 %v329, 0.0
    %v348 = vadd.f32 %v346, %v347
    %350 = vrot.lane.b32.xlu0 %v348, 96
    %v351 = vpop.permute.xlu0 %350
    %353 = vst.msk [vmem:[#allocation2] sm:$0xff] %vm279, %v351
    %v354 = vpack.c.bf16 %v348, %v348
    %356 = vrot.lane.b32.xlu0 %v354, 96
    %v357 = vpop.permute.xlu0 %356
    %v359 = vsel %vm279, %v357, 0
    %361 = vmatprep.subr.bf16.mxu0 0
    %362 = vmatpush1.bf16.msra.mxu0 0
    %363 = vmatprep.subr.bf16.mxu0 0
    %364 = vmatpush1.bf16.msra.mxu0 0
    %365 = vmatprep.subr.bf16.mxu0 0
    %366 = vmatpush1.bf16.msra.mxu0 0
    %367 = vmatprep.subr.bf16.mxu0 0
    %368 = vmatpush1.bf16.msra.mxu0 0
    %369 = vmatprep.subr.bf16.mxu0 0
    %370 = vmatpush1.bf16.msra.mxu0 0
    %371 = vmatprep.subr.bf16.mxu0 0
    %372 = vmatpush1.bf16.msra.mxu0 0
    %373 = vmatprep.subr.bf16.mxu0 0
    %374 = vmatpush1.bf16.msra.mxu0 %v276
    %375 = vmatprep.subr.bf16.mxu0 0
    %376 = vmatpush1.bf16.msra.mxu0 %v275
    %377 = vmatprep.subr.bf16.mxu0 0
    %378 = vmatpush2.bf16.msra.mxu0 0
    %379 = vmatprep.subr.bf16.mxu0 0
    %380 = vmatpush2.bf16.msra.mxu0 0
    %381 = vmatprep.subr.bf16.mxu0 0
    %382 = vmatpush2.bf16.msra.mxu0 0
    %383 = vmatprep.subr.bf16.mxu0 0
    %384 = vmatpush2.bf16.msra.mxu0 0
    %385 = vmatprep.subr.bf16.mxu0 0
    %386 = vmatpush2.bf16.msra.mxu0 0
    %387 = vmatprep.subr.bf16.mxu0 0
    %388 = vmatpush2.bf16.msra.mxu0 0
    %389 = vmatprep.subr.bf16.mxu0 0
    %390 = vmatpush2.bf16.msra.mxu0 0
    %391 = vmatprep.subr.bf16.mxu0 0
    %392 = vmatpush2.bf16.msra.mxu0 0
    %393 = vmatprep.mubr.bf16.mxu0 0
    %394 = vmatmul.mubr.bf16.gmra.mxu0 %v359
    %v395 = vpop.f32.mrf.mxu0
    %v396 = vadd.f32 %v265, %v395
    %v397 = vpop.f32.mrf.mxu0
    %v398 = vpop.f32.mrf.mxu0
    %v399 = vpop.f32.mrf.mxu0
    %400 = vdwg.mxu0
    %v401 = vadd.f32 %v183, %v396
    %v402 = vxor.u32 %v401, 2147483648
    %v403 = vmul.f32 %v402, 1.442695
    %v404 = vpow.pop %v403
    %v405 = vadd.f32 %v404, 1.0
    %v406 = vrcp.pop %v405
    %v407 = vmul.f32 1.0, %v406
    %409 = vrot.lane.b32.xlu0 %v396, 64
    %v410 = vpop.permute.xlu0 %409
    %v412 = vmul.f32 %v407, %v410
    %414 = vrot.lane.b32.xlu0 %v412, 64
    %v415 = vpop.permute.xlu0 %414
    %v417 = vadd.f32 %v183, %v415
    %v418 = vtanh.pop %v417
    %v419 = vsub.f32 1.0, %v407
    %421 = vrot.lane.b32.xlu0 %v418, 96
    %v422 = vpop.permute.xlu0 %421
    %v424 = vmul.f32 %v419, %v422
    %v425 = vmul.f32 %v407, %v348
    %v426 = vadd.f32 %v424, %v425
    %vm427 = vcmask 523520
    %428 = vst.msk [vmem:[#allocation2] sm:$0xff] %vm427, %v426
    %v429 = vpack.c.bf16 %v426, %v426
    %431 = vrot.lane.b32.xlu0 %v429, 96
    %v432 = vpop.permute.xlu0 %431
    %v434 = vsel %vm279, %v432, 0
    %436 = vmatprep.subr.bf16.mxu0 0
    %437 = vmatpush1.bf16.msra.mxu0 0
    %438 = vmatprep.subr.bf16.mxu0 0
    %439 = vmatpush1.bf16.msra.mxu0 0
    %440 = vmatprep.subr.bf16.mxu0 0
    %441 = vmatpush1.bf16.msra.mxu0 0
    %442 = vmatprep.subr.bf16.mxu0 0
    %443 = vmatpush1.bf16.msra.mxu0 0
    %444 = vmatprep.subr.bf16.mxu0 0
    %445 = vmatpush1.bf16.msra.mxu0 0
    %446 = vmatprep.subr.bf16.mxu0 0
    %447 = vmatpush1.bf16.msra.mxu0 0
    %448 = vmatprep.subr.bf16.mxu0 0
    %449 = vmatpush1.bf16.msra.mxu0 %v276
    %450 = vmatprep.subr.bf16.mxu0 0
    %451 = vmatpush1.bf16.msra.mxu0 %v275
    %452 = vmatprep.subr.bf16.mxu0 0
    %453 = vmatpush2.bf16.msra.mxu0 0
    %454 = vmatprep.subr.bf16.mxu0 0
    %455 = vmatpush2.bf16.msra.mxu0 0
    %456 = vmatprep.subr.bf16.mxu0 0
    %457 = vmatpush2.bf16.msra.mxu0 0
    %458 = vmatprep.subr.bf16.mxu0 0
    %459 = vmatpush2.bf16.msra.mxu0 0
    %460 = vmatprep.subr.bf16.mxu0 0
    %461 = vmatpush2.bf16.msra.mxu0 0
    %462 = vmatprep.subr.bf16.mxu0 0
    %463 = vmatpush2.bf16.msra.mxu0 0
    %464 = vmatprep.subr.bf16.mxu0 0
    %465 = vmatpush2.bf16.msra.mxu0 0
    %466 = vmatprep.subr.bf16.mxu0 0
    %467 = vmatpush2.bf16.msra.mxu0 0
    %468 = vmatprep.mubr.bf16.mxu0 0
    %469 = vmatmul.mubr.bf16.gmra.mxu0 %v434
    %v470 = vpop.f32.mrf.mxu0
    %v471 = vadd.f32 %v265, %v470
    %v472 = vpop.f32.mrf.mxu0
    %v473 = vpop.f32.mrf.mxu0
    %v474 = vpop.f32.mrf.mxu0
    %475 = vdwg.mxu0
    %v476 = vadd.f32 %v188, %v471
    %v477 = vxor.u32 %v476, 2147483648
    %v478 = vmul.f32 %v477, 1.442695
    %v479 = vpow.pop %v478
    %v480 = vadd.f32 %v479, 1.0
    %v481 = vrcp.pop %v480
    %v482 = vmul.f32 1.0, %v481
    %484 = vrot.lane.b32.xlu0 %v471, 64
    %v485 = vpop.permute.xlu0 %484
    %v487 = vmul.f32 %v482, %v485
    %489 = vrot.lane.b32.xlu0 %v487, 64
    %v490 = vpop.permute.xlu0 %489
    %v492 = vadd.f32 %v188, %v490
    %v493 = vtanh.pop %v492
    %v494 = vsub.f32 1.0, %v482
    %496 = vrot.lane.b32.xlu0 %v493, 96
    %v497 = vpop.permute.xlu0 %496
    %v499 = vmul.f32 %v494, %v497
    %v500 = vmul.f32 %v482, %v426
    %v501 = vadd.f32 %v499, %v500
    %503 = vrot.lane.b32.xlu0 %v501, 32
    %v504 = vpop.permute.xlu0 %503
    %vm506 = vcmask 785920
    %507 = vst.msk [vmem:[#allocation2] sm:$0xff] %vm506, %v504
    %v508 = vpack.c.bf16 %v501, %v501
    %510 = vrot.lane.b32.xlu0 %v508, 96
    %v511 = vpop.permute.xlu0 %510
    %v513 = vsel %vm279, %v511, 0
    %515 = vmatprep.subr.bf16.mxu0 0
    %516 = vmatpush1.bf16.msra.mxu0 0
    %517 = vmatprep.subr.bf16.mxu0 0
    %518 = vmatpush1.bf16.msra.mxu0 0
    %519 = vmatprep.subr.bf16.mxu0 0
    %520 = vmatpush1.bf16.msra.mxu0 0
    %521 = vmatprep.subr.bf16.mxu0 0
    %522 = vmatpush1.bf16.msra.mxu0 0
    %523 = vmatprep.subr.bf16.mxu0 0
    %524 = vmatpush1.bf16.msra.mxu0 0
    %525 = vmatprep.subr.bf16.mxu0 0
    %526 = vmatpush1.bf16.msra.mxu0 0
    %527 = vmatprep.subr.bf16.mxu0 0
    %528 = vmatpush1.bf16.msra.mxu0 %v276
    %529 = vmatprep.subr.bf16.mxu0 0
    %530 = vmatpush1.bf16.msra.mxu0 %v275
    %531 = vmatprep.subr.bf16.mxu0 0
    %532 = vmatpush2.bf16.msra.mxu0 0
    %533 = vmatprep.subr.bf16.mxu0 0
    %534 = vmatpush2.bf16.msra.mxu0 0
    %535 = vmatprep.subr.bf16.mxu0 0
    %536 = vmatpush2.bf16.msra.mxu0 0
    %537 = vmatprep.subr.bf16.mxu0 0
    %538 = vmatpush2.bf16.msra.mxu0 0
    %539 = vmatprep.subr.bf16.mxu0 0
    %540 = vmatpush2.bf16.msra.mxu0 0
    %541 = vmatprep.subr.bf16.mxu0 0
    %542 = vmatpush2.bf16.msra.mxu0 0
    %543 = vmatprep.subr.bf16.mxu0 0
    %544 = vmatpush2.bf16.msra.mxu0 0
    %545 = vmatprep.subr.bf16.mxu0 0
    %546 = vmatpush2.bf16.msra.mxu0 0
    %547 = vmatprep.mubr.bf16.mxu0 0
    %548 = vmatmul.mubr.bf16.gmra.mxu0 %v513
    %v549 = vpop.f32.mrf.mxu0
    %v550 = vadd.f32 %v265, %v549
    %v551 = vpop.f32.mrf.mxu0
    %v552 = vpop.f32.mrf.mxu0
    %v553 = vpop.f32.mrf.mxu0
    %554 = vdwg.mxu0
    %v555 = vadd.f32 %v193, %v550
    %v556 = vxor.u32 %v555, 2147483648
    %v557 = vmul.f32 %v556, 1.442695
    %v558 = vpow.pop %v557
    %v559 = vadd.f32 %v558, 1.0
    %v560 = vrcp.pop %v559
    %v561 = vmul.f32 1.0, %v560
    %563 = vrot.lane.b32.xlu0 %v550, 64
    %v564 = vpop.permute.xlu0 %563
    %v566 = vmul.f32 %v561, %v564
    %568 = vrot.lane.b32.xlu0 %v566, 64
    %v569 = vpop.permute.xlu0 %568
    %v571 = vadd.f32 %v193, %v569
    %v572 = vtanh.pop %v571
    %v573 = vsub.f32 1.0, %v561
    %575 = vrot.lane.b32.xlu0 %v572, 96
    %v576 = vpop.permute.xlu0 %575
    %v578 = vmul.f32 %v573, %v576
    %v579 = vmul.f32 %v561, %v501
    %v580 = vadd.f32 %v578, %v579
    %582 = vrot.lane.b32.xlu0 %v580, 64
    %v583 = vpop.permute.xlu0 %582
    %vm585 = vcmask 1048320
    %586 = vst.msk [vmem:[#allocation2] sm:$0xff] %vm585, %v583
    %v587 = vpack.c.bf16 %v580, %v580
    %589 = vrot.lane.b32.xlu0 %v587, 96
    %v590 = vpop.permute.xlu0 %589
    %v592 = vsel %vm279, %v590, 0
    %594 = vmatprep.subr.bf16.mxu0 0
    %595 = vmatpush1.bf16.msra.mxu0 0
    %596 = vmatprep.subr.bf16.mxu0 0
    %597 = vmatpush1.bf16.msra.mxu0 0
    %598 = vmatprep.subr.bf16.mxu0 0
    %599 = vmatpush1.bf16.msra.mxu0 0
    %600 = vmatprep.subr.bf16.mxu0 0
    %601 = vmatpush1.bf16.msra.mxu0 0
    %602 = vmatprep.subr.bf16.mxu0 0
    %603 = vmatpush1.bf16.msra.mxu0 0
    %604 = vmatprep.subr.bf16.mxu0 0
    %605 = vmatpush1.bf16.msra.mxu0 0
    %606 = vmatprep.subr.bf16.mxu0 0
    %607 = vmatpush1.bf16.msra.mxu0 %v276
    %608 = vmatprep.subr.bf16.mxu0 0
    %609 = vmatpush1.bf16.msra.mxu0 %v275
    %610 = vmatprep.subr.bf16.mxu0 0
    %611 = vmatpush2.bf16.msra.mxu0 0
    %612 = vmatprep.subr.bf16.mxu0 0
    %613 = vmatpush2.bf16.msra.mxu0 0
    %614 = vmatprep.subr.bf16.mxu0 0
    %615 = vmatpush2.bf16.msra.mxu0 0
    %616 = vmatprep.subr.bf16.mxu0 0
    %617 = vmatpush2.bf16.msra.mxu0 0
    %618 = vmatprep.subr.bf16.mxu0 0
    %619 = vmatpush2.bf16.msra.mxu0 0
    %620 = vmatprep.subr.bf16.mxu0 0
    %621 = vmatpush2.bf16.msra.mxu0 0
    %622 = vmatprep.subr.bf16.mxu0 0
    %623 = vmatpush2.bf16.msra.mxu0 0
    %624 = vmatprep.subr.bf16.mxu0 0
    %625 = vmatpush2.bf16.msra.mxu0 0
    %626 = vmatprep.mubr.bf16.mxu0 0
    %627 = vmatmul.mubr.bf16.gmra.mxu0 %v592
    %v628 = vpop.f32.mrf.mxu0
    %v629 = vadd.f32 %v265, %v628
    %v630 = vpop.f32.mrf.mxu0
    %v631 = vpop.f32.mrf.mxu0
    %v632 = vpop.f32.mrf.mxu0
    %633 = vdwg.mxu0
    %v634 = vadd.f32 %v198, %v629
    %v635 = vxor.u32 %v634, 2147483648
    %v636 = vmul.f32 %v635, 1.442695
    %v637 = vpow.pop %v636
    %v638 = vadd.f32 %v637, 1.0
    %v639 = vrcp.pop %v638
    %v640 = vmul.f32 1.0, %v639
    %642 = vrot.lane.b32.xlu0 %v629, 64
    %v643 = vpop.permute.xlu0 %642
    %v645 = vmul.f32 %v640, %v643
    %647 = vrot.lane.b32.xlu0 %v645, 64
    %v648 = vpop.permute.xlu0 %647
    %v650 = vadd.f32 %v198, %v648
    %v651 = vtanh.pop %v650
    %v652 = vsub.f32 1.0, %v640
    %654 = vrot.lane.b32.xlu0 %v651, 96
    %v655 = vpop.permute.xlu0 %654
    %v657 = vmul.f32 %v652, %v655
    %v658 = vmul.f32 %v640, %v580
    %v659 = vadd.f32 %v657, %v658
    %661 = vrot.lane.b32.xlu0 %v659, 96
    %v662 = vpop.permute.xlu0 %661
    %664 = vst.msk [vmem:[#allocation2 + $0x8] sm:$0xff] %vm279, %v662
    %v665 = vpack.c.bf16 %v659, %v659
    %667 = vrot.lane.b32.xlu0 %v665, 96
    %v668 = vpop.permute.xlu0 %667
    %v670 = vsel %vm279, %v668, 0
    %672 = vmatprep.subr.bf16.mxu0 0
    %673 = vmatpush1.bf16.msra.mxu0 0
    %674 = vmatprep.subr.bf16.mxu0 0
    %675 = vmatpush1.bf16.msra.mxu0 0
    %676 = vmatprep.subr.bf16.mxu0 0
    %677 = vmatpush1.bf16.msra.mxu0 0
    %678 = vmatprep.subr.bf16.mxu0 0
    %679 = vmatpush1.bf16.msra.mxu0 0
    %680 = vmatprep.subr.bf16.mxu0 0
    %681 = vmatpush1.bf16.msra.mxu0 0
    %682 = vmatprep.subr.bf16.mxu0 0
    %683 = vmatpush1.bf16.msra.mxu0 0
    %684 = vmatprep.subr.bf16.mxu0 0
    %685 = vmatpush1.bf16.msra.mxu0 %v276
    %686 = vmatprep.subr.bf16.mxu0 0
    %687 = vmatpush1.bf16.msra.mxu0 %v275
    %688 = vmatprep.subr.bf16.mxu0 0
    %689 = vmatpush2.bf16.msra.mxu0 0
    %690 = vmatprep.subr.bf16.mxu0 0
    %691 = vmatpush2.bf16.msra.mxu0 0
    %692 = vmatprep.subr.bf16.mxu0 0
    %693 = vmatpush2.bf16.msra.mxu0 0
    %694 = vmatprep.subr.bf16.mxu0 0
    %695 = vmatpush2.bf16.msra.mxu0 0
    %696 = vmatprep.subr.bf16.mxu0 0
    %697 = vmatpush2.bf16.msra.mxu0 0
    %698 = vmatprep.subr.bf16.mxu0 0
    %699 = vmatpush2.bf16.msra.mxu0 0
    %700 = vmatprep.subr.bf16.mxu0 0
    %701 = vmatpush2.bf16.msra.mxu0 0
    %702 = vmatprep.subr.bf16.mxu0 0
    %703 = vmatpush2.bf16.msra.mxu0 0
    %704 = vmatprep.mubr.bf16.mxu0 0
    %705 = vmatmul.mubr.bf16.gmra.mxu0 %v670
    %v706 = vpop.f32.mrf.mxu0
    %v707 = vadd.f32 %v265, %v706
    %v708 = vpop.f32.mrf.mxu0
    %v709 = vpop.f32.mrf.mxu0
    %v710 = vpop.f32.mrf.mxu0
    %711 = vdwg.mxu0
    %v712 = vadd.f32 %v203, %v707
    %v713 = vxor.u32 %v712, 2147483648
    %v714 = vmul.f32 %v713, 1.442695
    %v715 = vpow.pop %v714
    %v716 = vadd.f32 %v715, 1.0
    %v717 = vrcp.pop %v716
    %v718 = vmul.f32 1.0, %v717
    %720 = vrot.lane.b32.xlu0 %v707, 64
    %v721 = vpop.permute.xlu0 %720
    %v723 = vmul.f32 %v718, %v721
    %725 = vrot.lane.b32.xlu0 %v723, 64
    %v726 = vpop.permute.xlu0 %725
    %v728 = vadd.f32 %v203, %v726
    %v729 = vtanh.pop %v728
    %v730 = vsub.f32 1.0, %v718
    %732 = vrot.lane.b32.xlu0 %v729, 96
    %v733 = vpop.permute.xlu0 %732
    %v735 = vmul.f32 %v730, %v733
    %v736 = vmul.f32 %v718, %v659
    %v737 = vadd.f32 %v735, %v736
    %738 = vst.msk [vmem:[#allocation2 + $0x8] sm:$0xff] %vm427, %v737
    %v739 = vpack.c.bf16 %v737, %v737
    %741 = vrot.lane.b32.xlu0 %v739, 96
    %v742 = vpop.permute.xlu0 %741
    %v744 = vsel %vm279, %v742, 0
    %746 = vmatprep.subr.bf16.mxu0 0
    %747 = vmatpush1.bf16.msra.mxu0 0
    %748 = vmatprep.subr.bf16.mxu0 0
    %749 = vmatpush1.bf16.msra.mxu0 0
    %750 = vmatprep.subr.bf16.mxu0 0
    %751 = vmatpush1.bf16.msra.mxu0 0
    %752 = vmatprep.subr.bf16.mxu0 0
    %753 = vmatpush1.bf16.msra.mxu0 0
    %754 = vmatprep.subr.bf16.mxu0 0
    %755 = vmatpush1.bf16.msra.mxu0 0
    %756 = vmatprep.subr.bf16.mxu0 0
    %757 = vmatpush1.bf16.msra.mxu0 0
    %758 = vmatprep.subr.bf16.mxu0 0
    %759 = vmatpush1.bf16.msra.mxu0 %v276
    %760 = vmatprep.subr.bf16.mxu0 0
    %761 = vmatpush1.bf16.msra.mxu0 %v275
    %762 = vmatprep.subr.bf16.mxu0 0
    %763 = vmatpush2.bf16.msra.mxu0 0
    %764 = vmatprep.subr.bf16.mxu0 0
    %765 = vmatpush2.bf16.msra.mxu0 0
    %766 = vmatprep.subr.bf16.mxu0 0
    %767 = vmatpush2.bf16.msra.mxu0 0
    %768 = vmatprep.subr.bf16.mxu0 0
    %769 = vmatpush2.bf16.msra.mxu0 0
    %770 = vmatprep.subr.bf16.mxu0 0
    %771 = vmatpush2.bf16.msra.mxu0 0
    %772 = vmatprep.subr.bf16.mxu0 0
    %773 = vmatpush2.bf16.msra.mxu0 0
    %774 = vmatprep.subr.bf16.mxu0 0
    %775 = vmatpush2.bf16.msra.mxu0 0
    %776 = vmatprep.subr.bf16.mxu0 0
    %777 = vmatpush2.bf16.msra.mxu0 0
    %778 = vmatprep.mubr.bf16.mxu0 0
    %779 = vmatmul.mubr.bf16.gmra.mxu0 %v744
    %v780 = vpop.f32.mrf.mxu0
    %v781 = vadd.f32 %v265, %v780
    %v782 = vpop.f32.mrf.mxu0
    %v783 = vpop.f32.mrf.mxu0
    %v784 = vpop.f32.mrf.mxu0
    %785 = vdwg.mxu0
    %v786 = vadd.f32 %v208, %v781
    %v787 = vxor.u32 %v786, 2147483648
    %v788 = vmul.f32 %v787, 1.442695
    %v789 = vpow.pop %v788
    %v790 = vadd.f32 %v789, 1.0
    %v791 = vrcp.pop %v790
    %v792 = vmul.f32 1.0, %v791
    %794 = vrot.lane.b32.xlu0 %v781, 64
    %v795 = vpop.permute.xlu0 %794
    %v797 = vmul.f32 %v792, %v795
    %799 = vrot.lane.b32.xlu0 %v797, 64
    %v800 = vpop.permute.xlu0 %799
    %v802 = vadd.f32 %v208, %v800
    %v803 = vtanh.pop %v802
    %v804 = vsub.f32 1.0, %v792
    %806 = vrot.lane.b32.xlu0 %v803, 96
    %v807 = vpop.permute.xlu0 %806
    %v809 = vmul.f32 %v804, %v807
    %v810 = vmul.f32 %v792, %v737
    %v811 = vadd.f32 %v809, %v810
    %813 = vrot.lane.b32.xlu0 %v811, 32
    %v814 = vpop.permute.xlu0 %813
    %816 = vst.msk [vmem:[#allocation2 + $0x8] sm:$0xff] %vm506, %v814
    %v817 = vpack.c.bf16 %v811, %v811
    %819 = vrot.lane.b32.xlu0 %v817, 96
    %v820 = vpop.permute.xlu0 %819
    %v822 = vsel %vm279, %v820, 0
    %824 = vmatprep.subr.bf16.mxu0 0
    %825 = vmatpush1.bf16.msra.mxu0 0
    %826 = vmatprep.subr.bf16.mxu0 0
    %827 = vmatpush1.bf16.msra.mxu0 0
    %828 = vmatprep.subr.bf16.mxu0 0
    %829 = vmatpush1.bf16.msra.mxu0 0
    %830 = vmatprep.subr.bf16.mxu0 0
    %831 = vmatpush1.bf16.msra.mxu0 0
    %832 = vmatprep.subr.bf16.mxu0 0
    %833 = vmatpush1.bf16.msra.mxu0 0
    %834 = vmatprep.subr.bf16.mxu0 0
    %835 = vmatpush1.bf16.msra.mxu0 0
    %836 = vmatprep.subr.bf16.mxu0 0
    %837 = vmatpush1.bf16.msra.mxu0 %v276
    %838 = vmatprep.subr.bf16.mxu0 0
    %839 = vmatpush1.bf16.msra.mxu0 %v275
    %840 = vmatprep.subr.bf16.mxu0 0
    %841 = vmatpush2.bf16.msra.mxu0 0
    %842 = vmatprep.subr.bf16.mxu0 0
    %843 = vmatpush2.bf16.msra.mxu0 0
    %844 = vmatprep.subr.bf16.mxu0 0
    %845 = vmatpush2.bf16.msra.mxu0 0
    %846 = vmatprep.subr.bf16.mxu0 0
    %847 = vmatpush2.bf16.msra.mxu0 0
    %848 = vmatprep.subr.bf16.mxu0 0
    %849 = vmatpush2.bf16.msra.mxu0 0
    %850 = vmatprep.subr.bf16.mxu0 0
    %851 = vmatpush2.bf16.msra.mxu0 0
    %852 = vmatprep.subr.bf16.mxu0 0
    %853 = vmatpush2.bf16.msra.mxu0 0
    %854 = vmatprep.subr.bf16.mxu0 0
    %855 = vmatpush2.bf16.msra.mxu0 0
    %856 = vmatprep.mubr.bf16.mxu0 0
    %857 = vmatmul.mubr.bf16.gmra.mxu0 %v822
    %v858 = vpop.f32.mrf.mxu0
    %v859 = vadd.f32 %v265, %v858
    %v860 = vpop.f32.mrf.mxu0
    %v861 = vpop.f32.mrf.mxu0
    %v862 = vpop.f32.mrf.mxu0
    %863 = vdwg.mxu0
    %v864 = vadd.f32 %v213, %v859
    %v865 = vxor.u32 %v864, 2147483648
    %v866 = vmul.f32 %v865, 1.442695
    %v867 = vpow.pop %v866
    %v868 = vadd.f32 %v867, 1.0
    %v869 = vrcp.pop %v868
    %v870 = vmul.f32 1.0, %v869
    %872 = vrot.lane.b32.xlu0 %v859, 64
    %v873 = vpop.permute.xlu0 %872
    %v875 = vmul.f32 %v870, %v873
    %877 = vrot.lane.b32.xlu0 %v875, 64
    %v878 = vpop.permute.xlu0 %877
    %v880 = vadd.f32 %v213, %v878
    %v881 = vtanh.pop %v880
    %v882 = vsub.f32 1.0, %v870
    %884 = vrot.lane.b32.xlu0 %v881, 96
    %v885 = vpop.permute.xlu0 %884
    %v887 = vmul.f32 %v882, %v885
    %v888 = vmul.f32 %v870, %v811
    %v889 = vadd.f32 %v887, %v888
    %891 = vrot.lane.b32.xlu0 %v889, 64
    %v892 = vpop.permute.xlu0 %891
    %894 = vst.msk [vmem:[#allocation2 + $0x8] sm:$0xff] %vm585, %v892
    %v895 = vpack.c.bf16 %v889, %v889
    %897 = vrot.lane.b32.xlu0 %v895, 96
    %v898 = vpop.permute.xlu0 %897
    %v900 = vsel %vm279, %v898, 0
    %902 = vmatprep.subr.bf16.mxu0 0
    %903 = vmatpush1.bf16.msra.mxu0 0
    %904 = vmatprep.subr.bf16.mxu0 0
    %905 = vmatpush1.bf16.msra.mxu0 0
    %906 = vmatprep.subr.bf16.mxu0 0
    %907 = vmatpush1.bf16.msra.mxu0 0
    %908 = vmatprep.subr.bf16.mxu0 0
    %909 = vmatpush1.bf16.msra.mxu0 0
    %910 = vmatprep.subr.bf16.mxu0 0
    %911 = vmatpush1.bf16.msra.mxu0 0
    %912 = vmatprep.subr.bf16.mxu0 0
    %913 = vmatpush1.bf16.msra.mxu0 0
    %914 = vmatprep.subr.bf16.mxu0 0
    %915 = vmatpush1.bf16.msra.mxu0 %v276
    %916 = vmatprep.subr.bf16.mxu0 0
    %917 = vmatpush1.bf16.msra.mxu0 %v275
    %918 = vmatprep.subr.bf16.mxu0 0
    %919 = vmatpush2.bf16.msra.mxu0 0
    %920 = vmatprep.subr.bf16.mxu0 0
    %921 = vmatpush2.bf16.msra.mxu0 0
    %922 = vmatprep.subr.bf16.mxu0 0
    %923 = vmatpush2.bf16.msra.mxu0 0
    %924 = vmatprep.subr.bf16.mxu0 0
    %925 = vmatpush2.bf16.msra.mxu0 0
    %926 = vmatprep.subr.bf16.mxu0 0
    %927 = vmatpush2.bf16.msra.mxu0 0
    %928 = vmatprep.subr.bf16.mxu0 0
    %929 = vmatpush2.bf16.msra.mxu0 0
    %930 = vmatprep.subr.bf16.mxu0 0
    %931 = vmatpush2.bf16.msra.mxu0 0
    %932 = vmatprep.subr.bf16.mxu0 0
    %933 = vmatpush2.bf16.msra.mxu0 0
    %934 = vmatprep.mubr.bf16.mxu0 0
    %935 = vmatmul.mubr.bf16.gmra.mxu0 %v900
    %v936 = vpop.f32.mrf.mxu0
    %v937 = vadd.f32 %v265, %v936
    %v938 = vpop.f32.mrf.mxu0
    %v939 = vpop.f32.mrf.mxu0
    %v940 = vpop.f32.mrf.mxu0
    %941 = vdwg.mxu0
    %v942 = vadd.f32 %v218, %v937
    %v943 = vxor.u32 %v942, 2147483648
    %v944 = vmul.f32 %v943, 1.442695
    %v945 = vpow.pop %v944
    %v946 = vadd.f32 %v945, 1.0
    %v947 = vrcp.pop %v946
    %v948 = vmul.f32 1.0, %v947
    %950 = vrot.lane.b32.xlu0 %v937, 64
    %v951 = vpop.permute.xlu0 %950
    %v953 = vmul.f32 %v948, %v951
    %955 = vrot.lane.b32.xlu0 %v953, 64
    %v956 = vpop.permute.xlu0 %955
    %v958 = vadd.f32 %v218, %v956
    %v959 = vtanh.pop %v958
    %v960 = vsub.f32 1.0, %v948
    %962 = vrot.lane.b32.xlu0 %v959, 96
    %v963 = vpop.permute.xlu0 %962
    %v965 = vmul.f32 %v960, %v963
    %v966 = vmul.f32 %v948, %v889
    %v967 = vadd.f32 %v965, %v966
    %969 = vrot.lane.b32.xlu0 %v967, 96
    %v970 = vpop.permute.xlu0 %969
    %972 = vst.msk [vmem:[#allocation2 + $0x10] sm:$0xff] %vm279, %v970
    %v973 = vpack.c.bf16 %v967, %v967
    %975 = vrot.lane.b32.xlu0 %v973, 96
    %v976 = vpop.permute.xlu0 %975
    %v978 = vsel %vm279, %v976, 0
    %980 = vmatprep.subr.bf16.mxu0 0
    %981 = vmatpush1.bf16.msra.mxu0 0
    %982 = vmatprep.subr.bf16.mxu0 0
    %983 = vmatpush1.bf16.msra.mxu0 0
    %984 = vmatprep.subr.bf16.mxu0 0
    %985 = vmatpush1.bf16.msra.mxu0 0
    %986 = vmatprep.subr.bf16.mxu0 0
    %987 = vmatpush1.bf16.msra.mxu0 0
    %988 = vmatprep.subr.bf16.mxu0 0
    %989 = vmatpush1.bf16.msra.mxu0 0
    %990 = vmatprep.subr.bf16.mxu0 0
    %991 = vmatpush1.bf16.msra.mxu0 0
    %992 = vmatprep.subr.bf16.mxu0 0
    %993 = vmatpush1.bf16.msra.mxu0 %v276
    %994 = vmatprep.subr.bf16.mxu0 0
    %995 = vmatpush1.bf16.msra.mxu0 %v275
    %996 = vmatprep.subr.bf16.mxu0 0
    %997 = vmatpush2.bf16.msra.mxu0 0
    %998 = vmatprep.subr.bf16.mxu0 0
    %999 = vmatpush2.bf16.msra.mxu0 0
    %1000 = vmatprep.subr.bf16.mxu0 0
    %1001 = vmatpush2.bf16.msra.mxu0 0
    %1002 = vmatprep.subr.bf16.mxu0 0
    %1003 = vmatpush2.bf16.msra.mxu0 0
    %1004 = vmatprep.subr.bf16.mxu0 0
    %1005 = vmatpush2.bf16.msra.mxu0 0
    %1006 = vmatprep.subr.bf16.mxu0 0
    %1007 = vmatpush2.bf16.msra.mxu0 0
    %1008 = vmatprep.subr.bf16.mxu0 0
    %1009 = vmatpush2.bf16.msra.mxu0 0
    %1010 = vmatprep.subr.bf16.mxu0 0
    %1011 = vmatpush2.bf16.msra.mxu0 0
    %1012 = vmatprep.mubr.bf16.mxu0 0
    %1013 = vmatmul.mubr.bf16.gmra.mxu0 %v978
    %v1014 = vpop.f32.mrf.mxu0
    %v1015 = vadd.f32 %v265, %v1014
    %v1016 = vpop.f32.mrf.mxu0
    %v1017 = vpop.f32.mrf.mxu0
    %v1018 = vpop.f32.mrf.mxu0
    %1019 = vdwg.mxu0
    %v1020 = vadd.f32 %v223, %v1015
    %v1021 = vxor.u32 %v1020, 2147483648
    %v1022 = vmul.f32 %v1021, 1.442695
    %v1023 = vpow.pop %v1022
    %v1024 = vadd.f32 %v1023, 1.0
    %v1025 = vrcp.pop %v1024
    %v1026 = vmul.f32 1.0, %v1025
    %1028 = vrot.lane.b32.xlu0 %v1015, 64
    %v1029 = vpop.permute.xlu0 %1028
    %v1031 = vmul.f32 %v1026, %v1029
    %1033 = vrot.lane.b32.xlu0 %v1031, 64
    %v1034 = vpop.permute.xlu0 %1033
    %v1036 = vadd.f32 %v223, %v1034
    %v1037 = vtanh.pop %v1036
    %v1038 = vsub.f32 1.0, %v1026
    %1040 = vrot.lane.b32.xlu0 %v1037, 96
    %v1041 = vpop.permute.xlu0 %1040
    %v1043 = vmul.f32 %v1038, %v1041
    %v1044 = vmul.f32 %v1026, %v967
    %v1045 = vadd.f32 %v1043, %v1044
    %1046 = vst.msk [vmem:[#allocation2 + $0x10] sm:$0xff] %vm427, %v1045
    %v1047 = vpack.c.bf16 %v1045, %v1045
    %1049 = vrot.lane.b32.xlu0 %v1047, 96
    %v1050 = vpop.permute.xlu0 %1049
    %v1052 = vsel %vm279, %v1050, 0
    %1054 = vmatprep.subr.bf16.mxu0 0
    %1055 = vmatpush1.bf16.msra.mxu0 0
    %1056 = vmatprep.subr.bf16.mxu0 0
    %1057 = vmatpush1.bf16.msra.mxu0 0
    %1058 = vmatprep.subr.bf16.mxu0 0
    %1059 = vmatpush1.bf16.msra.mxu0 0
    %1060 = vmatprep.subr.bf16.mxu0 0
    %1061 = vmatpush1.bf16.msra.mxu0 0
    %1062 = vmatprep.subr.bf16.mxu0 0
    %1063 = vmatpush1.bf16.msra.mxu0 0
    %1064 = vmatprep.subr.bf16.mxu0 0
    %1065 = vmatpush1.bf16.msra.mxu0 0
    %1066 = vmatprep.subr.bf16.mxu0 0
    %1067 = vmatpush1.bf16.msra.mxu0 %v276
    %1068 = vmatprep.subr.bf16.mxu0 0
    %1069 = vmatpush1.bf16.msra.mxu0 %v275
    %1070 = vmatprep.subr.bf16.mxu0 0
    %1071 = vmatpush2.bf16.msra.mxu0 0
    %1072 = vmatprep.subr.bf16.mxu0 0
    %1073 = vmatpush2.bf16.msra.mxu0 0
    %1074 = vmatprep.subr.bf16.mxu0 0
    %1075 = vmatpush2.bf16.msra.mxu0 0
    %1076 = vmatprep.subr.bf16.mxu0 0
    %1077 = vmatpush2.bf16.msra.mxu0 0
    %1078 = vmatprep.subr.bf16.mxu0 0
    %1079 = vmatpush2.bf16.msra.mxu0 0
    %1080 = vmatprep.subr.bf16.mxu0 0
    %1081 = vmatpush2.bf16.msra.mxu0 0
    %1082 = vmatprep.subr.bf16.mxu0 0
    %1083 = vmatpush2.bf16.msra.mxu0 0
    %1084 = vmatprep.subr.bf16.mxu0 0
    %1085 = vmatpush2.bf16.msra.mxu0 0
    %1086 = vmatprep.mubr.bf16.mxu0 0
    %1087 = vmatmul.mubr.bf16.gmra.mxu0 %v1052
    %v1088 = vpop.f32.mrf.mxu0
    %v1089 = vadd.f32 %v265, %v1088
    %v1090 = vpop.f32.mrf.mxu0
    %v1091 = vpop.f32.mrf.mxu0
    %v1092 = vpop.f32.mrf.mxu0
    %1093 = vdwg.mxu0
    %v1094 = vadd.f32 %v228, %v1089
    %v1095 = vxor.u32 %v1094, 2147483648
    %v1096 = vmul.f32 %v1095, 1.442695
    %v1097 = vpow.pop %v1096
    %v1098 = vadd.f32 %v1097, 1.0
    %v1099 = vrcp.pop %v1098
    %v1100 = vmul.f32 1.0, %v1099
    %1102 = vrot.lane.b32.xlu0 %v1089, 64
    %v1103 = vpop.permute.xlu0 %1102
    %v1105 = vmul.f32 %v1100, %v1103
    %1107 = vrot.lane.b32.xlu0 %v1105, 64
    %v1108 = vpop.permute.xlu0 %1107
    %v1110 = vadd.f32 %v228, %v1108
    %v1111 = vtanh.pop %v1110
    %v1112 = vsub.f32 1.0, %v1100
    %1114 = vrot.lane.b32.xlu0 %v1111, 96
    %v1115 = vpop.permute.xlu0 %1114
    %v1117 = vmul.f32 %v1112, %v1115
    %v1118 = vmul.f32 %v1100, %v1045
    %v1119 = vadd.f32 %v1117, %v1118
    %1121 = vrot.lane.b32.xlu0 %v1119, 32
    %v1122 = vpop.permute.xlu0 %1121
    %1124 = vst.msk [vmem:[#allocation2 + $0x10] sm:$0xff] %vm506, %v1122
    %v1125 = vpack.c.bf16 %v1119, %v1119
    %1127 = vrot.lane.b32.xlu0 %v1125, 96
    %v1128 = vpop.permute.xlu0 %1127
    %v1130 = vsel %vm279, %v1128, 0
    %1132 = vmatprep.subr.bf16.mxu0 0
    %1133 = vmatpush1.bf16.msra.mxu0 0
    %1134 = vmatprep.subr.bf16.mxu0 0
    %1135 = vmatpush1.bf16.msra.mxu0 0
    %1136 = vmatprep.subr.bf16.mxu0 0
    %1137 = vmatpush1.bf16.msra.mxu0 0
    %1138 = vmatprep.subr.bf16.mxu0 0
    %1139 = vmatpush1.bf16.msra.mxu0 0
    %1140 = vmatprep.subr.bf16.mxu0 0
    %1141 = vmatpush1.bf16.msra.mxu0 0
    %1142 = vmatprep.subr.bf16.mxu0 0
    %1143 = vmatpush1.bf16.msra.mxu0 0
    %1144 = vmatprep.subr.bf16.mxu0 0
    %1145 = vmatpush1.bf16.msra.mxu0 %v276
    %1146 = vmatprep.subr.bf16.mxu0 0
    %1147 = vmatpush1.bf16.msra.mxu0 %v275
    %1148 = vmatprep.subr.bf16.mxu0 0
    %1149 = vmatpush2.bf16.msra.mxu0 0
    %1150 = vmatprep.subr.bf16.mxu0 0
    %1151 = vmatpush2.bf16.msra.mxu0 0
    %1152 = vmatprep.subr.bf16.mxu0 0
    %1153 = vmatpush2.bf16.msra.mxu0 0
    %1154 = vmatprep.subr.bf16.mxu0 0
    %1155 = vmatpush2.bf16.msra.mxu0 0
    %1156 = vmatprep.subr.bf16.mxu0 0
    %1157 = vmatpush2.bf16.msra.mxu0 0
    %1158 = vmatprep.subr.bf16.mxu0 0
    %1159 = vmatpush2.bf16.msra.mxu0 0
    %1160 = vmatprep.subr.bf16.mxu0 0
    %1161 = vmatpush2.bf16.msra.mxu0 0
    %1162 = vmatprep.subr.bf16.mxu0 0
    %1163 = vmatpush2.bf16.msra.mxu0 0
    %1164 = vmatprep.mubr.bf16.mxu0 0
    %1165 = vmatmul.mubr.bf16.gmra.mxu0 %v1130
    %v1166 = vpop.f32.mrf.mxu0
    %v1167 = vadd.f32 %v265, %v1166
    %v1168 = vpop.f32.mrf.mxu0
    %v1169 = vpop.f32.mrf.mxu0
    %v1170 = vpop.f32.mrf.mxu0
    %1171 = vdwg.mxu0
    %v1172 = vadd.f32 %v233, %v1167
    %v1173 = vxor.u32 %v1172, 2147483648
    %v1174 = vmul.f32 %v1173, 1.442695
    %v1175 = vpow.pop %v1174
    %v1176 = vadd.f32 %v1175, 1.0
    %v1177 = vrcp.pop %v1176
    %v1178 = vmul.f32 1.0, %v1177
    %1180 = vrot.lane.b32.xlu0 %v1167, 64
    %v1181 = vpop.permute.xlu0 %1180
    %v1183 = vmul.f32 %v1178, %v1181
    %1185 = vrot.lane.b32.xlu0 %v1183, 64
    %v1186 = vpop.permute.xlu0 %1185
    %v1188 = vadd.f32 %v233, %v1186
    %v1189 = vtanh.pop %v1188
    %v1190 = vsub.f32 1.0, %v1178
    %1192 = vrot.lane.b32.xlu0 %v1189, 96
    %v1193 = vpop.permute.xlu0 %1192
    %v1195 = vmul.f32 %v1190, %v1193
    %v1196 = vmul.f32 %v1178, %v1119
    %v1197 = vadd.f32 %v1195, %v1196
    %1199 = vrot.lane.b32.xlu0 %v1197, 64
    %v1200 = vpop.permute.xlu0 %1199
    %1202 = vst.msk [vmem:[#allocation2 + $0x10] sm:$0xff] %vm585, %v1200
    %v1203 = vpack.c.bf16 %v1197, %v1197
    %1205 = vrot.lane.b32.xlu0 %v1203, 96
    %v1206 = vpop.permute.xlu0 %1205
    %v1208 = vsel %vm279, %v1206, 0
    %1210 = vmatprep.subr.bf16.mxu0 0
    %1211 = vmatpush1.bf16.msra.mxu0 0
    %1212 = vmatprep.subr.bf16.mxu0 0
    %1213 = vmatpush1.bf16.msra.mxu0 0
    %1214 = vmatprep.subr.bf16.mxu0 0
    %1215 = vmatpush1.bf16.msra.mxu0 0
    %1216 = vmatprep.subr.bf16.mxu0 0
    %1217 = vmatpush1.bf16.msra.mxu0 0
    %1218 = vmatprep.subr.bf16.mxu0 0
    %1219 = vmatpush1.bf16.msra.mxu0 0
    %1220 = vmatprep.subr.bf16.mxu0 0
    %1221 = vmatpush1.bf16.msra.mxu0 0
    %1222 = vmatprep.subr.bf16.mxu0 0
    %1223 = vmatpush1.bf16.msra.mxu0 %v276
    %1224 = vmatprep.subr.bf16.mxu0 0
    %1225 = vmatpush1.bf16.msra.mxu0 %v275
    %1226 = vmatprep.subr.bf16.mxu0 0
    %1227 = vmatpush2.bf16.msra.mxu0 0
    %1228 = vmatprep.subr.bf16.mxu0 0
    %1229 = vmatpush2.bf16.msra.mxu0 0
    %1230 = vmatprep.subr.bf16.mxu0 0
    %1231 = vmatpush2.bf16.msra.mxu0 0
    %1232 = vmatprep.subr.bf16.mxu0 0
    %1233 = vmatpush2.bf16.msra.mxu0 0
    %1234 = vmatprep.subr.bf16.mxu0 0
    %1235 = vmatpush2.bf16.msra.mxu0 0
    %1236 = vmatprep.subr.bf16.mxu0 0
    %1237 = vmatpush2.bf16.msra.mxu0 0
    %1238 = vmatprep.subr.bf16.mxu0 0
    %1239 = vmatpush2.bf16.msra.mxu0 0
    %1240 = vmatprep.subr.bf16.mxu0 0
    %1241 = vmatpush2.bf16.msra.mxu0 0
    %1242 = vmatprep.mubr.bf16.mxu0 0
    %1243 = vmatmul.mubr.bf16.gmra.mxu0 %v1208
    %v1244 = vpop.f32.mrf.mxu0
    %v1245 = vadd.f32 %v265, %v1244
    %v1246 = vpop.f32.mrf.mxu0
    %v1247 = vpop.f32.mrf.mxu0
    %v1248 = vpop.f32.mrf.mxu0
    %1249 = vdwg.mxu0
    %v1250 = vadd.f32 %v238, %v1245
    %v1251 = vxor.u32 %v1250, 2147483648
    %v1252 = vmul.f32 %v1251, 1.442695
    %v1253 = vpow.pop %v1252
    %v1254 = vadd.f32 %v1253, 1.0
    %v1255 = vrcp.pop %v1254
    %v1256 = vmul.f32 1.0, %v1255
    %1258 = vrot.lane.b32.xlu0 %v1245, 64
    %v1259 = vpop.permute.xlu0 %1258
    %v1261 = vmul.f32 %v1256, %v1259
    %1263 = vrot.lane.b32.xlu0 %v1261, 64
    %v1264 = vpop.permute.xlu0 %1263
    %v1266 = vadd.f32 %v238, %v1264
    %v1267 = vtanh.pop %v1266
    %v1268 = vsub.f32 1.0, %v1256
    %1270 = vrot.lane.b32.xlu0 %v1267, 96
    %v1271 = vpop.permute.xlu0 %1270
    %v1273 = vmul.f32 %v1268, %v1271
    %v1274 = vmul.f32 %v1256, %v1197
    %v1275 = vadd.f32 %v1273, %v1274
    %1277 = vrot.lane.b32.xlu0 %v1275, 96
    %v1278 = vpop.permute.xlu0 %1277
    %1280 = vst.msk [vmem:[#allocation2 + $0x18] sm:$0xff] %vm279, %v1278
    %v1281 = vpack.c.bf16 %v1275, %v1275
    %1283 = vrot.lane.b32.xlu0 %v1281, 96
    %v1284 = vpop.permute.xlu0 %1283
    %v1286 = vsel %vm279, %v1284, 0
    %1288 = vmatprep.subr.bf16.mxu0 0
    %1289 = vmatpush1.bf16.msra.mxu0 0
    %1290 = vmatprep.subr.bf16.mxu0 0
    %1291 = vmatpush1.bf16.msra.mxu0 0
    %1292 = vmatprep.subr.bf16.mxu0 0
    %1293 = vmatpush1.bf16.msra.mxu0 0
    %1294 = vmatprep.subr.bf16.mxu0 0
    %1295 = vmatpush1.bf16.msra.mxu0 0
    %1296 = vmatprep.subr.bf16.mxu0 0
    %1297 = vmatpush1.bf16.msra.mxu0 0
    %1298 = vmatprep.subr.bf16.mxu0 0
    %1299 = vmatpush1.bf16.msra.mxu0 0
    %1300 = vmatprep.subr.bf16.mxu0 0
    %1301 = vmatpush1.bf16.msra.mxu0 %v276
    %1302 = vmatprep.subr.bf16.mxu0 0
    %1303 = vmatpush1.bf16.msra.mxu0 %v275
    %1304 = vmatprep.subr.bf16.mxu0 0
    %1305 = vmatpush2.bf16.msra.mxu0 0
    %1306 = vmatprep.subr.bf16.mxu0 0
    %1307 = vmatpush2.bf16.msra.mxu0 0
    %1308 = vmatprep.subr.bf16.mxu0 0
    %1309 = vmatpush2.bf16.msra.mxu0 0
    %1310 = vmatprep.subr.bf16.mxu0 0
    %1311 = vmatpush2.bf16.msra.mxu0 0
    %1312 = vmatprep.subr.bf16.mxu0 0
    %1313 = vmatpush2.bf16.msra.mxu0 0
    %1314 = vmatprep.subr.bf16.mxu0 0
    %1315 = vmatpush2.bf16.msra.mxu0 0
    %1316 = vmatprep.subr.bf16.mxu0 0
    %1317 = vmatpush2.bf16.msra.mxu0 0
    %1318 = vmatprep.subr.bf16.mxu0 0
    %1319 = vmatpush2.bf16.msra.mxu0 0
    %1320 = vmatprep.mubr.bf16.mxu0 0
    %1321 = vmatmul.mubr.bf16.gmra.mxu0 %v1286
    %v1322 = vpop.f32.mrf.mxu0
    %v1323 = vadd.f32 %v265, %v1322
    %v1324 = vpop.f32.mrf.mxu0
    %v1325 = vpop.f32.mrf.mxu0
    %v1326 = vpop.f32.mrf.mxu0
    %1327 = vdwg.mxu0
    %v1328 = vadd.f32 %v243, %v1323
    %v1329 = vxor.u32 %v1328, 2147483648
    %v1330 = vmul.f32 %v1329, 1.442695
    %v1331 = vpow.pop %v1330
    %v1332 = vadd.f32 %v1331, 1.0
    %v1333 = vrcp.pop %v1332
    %v1334 = vmul.f32 1.0, %v1333
    %1336 = vrot.lane.b32.xlu0 %v1323, 64
    %v1337 = vpop.permute.xlu0 %1336
    %v1339 = vmul.f32 %v1334, %v1337
    %1341 = vrot.lane.b32.xlu0 %v1339, 64
    %v1342 = vpop.permute.xlu0 %1341
    %v1344 = vadd.f32 %v243, %v1342
    %v1345 = vtanh.pop %v1344
    %v1346 = vsub.f32 1.0, %v1334
    %1348 = vrot.lane.b32.xlu0 %v1345, 96
    %v1349 = vpop.permute.xlu0 %1348
    %v1351 = vmul.f32 %v1346, %v1349
    %v1352 = vmul.f32 %v1334, %v1275
    %v1353 = vadd.f32 %v1351, %v1352
    %1354 = vst.msk [vmem:[#allocation2 + $0x18] sm:$0xff] %vm427, %v1353
    %v1355 = vpack.c.bf16 %v1353, %v1353
    %1357 = vrot.lane.b32.xlu0 %v1355, 96
    %v1358 = vpop.permute.xlu0 %1357
    %v1360 = vsel %vm279, %v1358, 0
    %1362 = vmatprep.subr.bf16.mxu0 0
    %1363 = vmatpush1.bf16.msra.mxu0 0
    %1364 = vmatprep.subr.bf16.mxu0 0
    %1365 = vmatpush1.bf16.msra.mxu0 0
    %1366 = vmatprep.subr.bf16.mxu0 0
    %1367 = vmatpush1.bf16.msra.mxu0 0
    %1368 = vmatprep.subr.bf16.mxu0 0
    %1369 = vmatpush1.bf16.msra.mxu0 0
    %1370 = vmatprep.subr.bf16.mxu0 0
    %1371 = vmatpush1.bf16.msra.mxu0 0
    %1372 = vmatprep.subr.bf16.mxu0 0
    %1373 = vmatpush1.bf16.msra.mxu0 0
    %1374 = vmatprep.subr.bf16.mxu0 0
    %1375 = vmatpush1.bf16.msra.mxu0 %v276
    %1376 = vmatprep.subr.bf16.mxu0 0
    %1377 = vmatpush1.bf16.msra.mxu0 %v275
    %1378 = vmatprep.subr.bf16.mxu0 0
    %1379 = vmatpush2.bf16.msra.mxu0 0
    %1380 = vmatprep.subr.bf16.mxu0 0
    %1381 = vmatpush2.bf16.msra.mxu0 0
    %1382 = vmatprep.subr.bf16.mxu0 0
    %1383 = vmatpush2.bf16.msra.mxu0 0
    %1384 = vmatprep.subr.bf16.mxu0 0
    %1385 = vmatpush2.bf16.msra.mxu0 0
    %1386 = vmatprep.subr.bf16.mxu0 0
    %1387 = vmatpush2.bf16.msra.mxu0 0
    %1388 = vmatprep.subr.bf16.mxu0 0
    %1389 = vmatpush2.bf16.msra.mxu0 0
    %1390 = vmatprep.subr.bf16.mxu0 0
    %1391 = vmatpush2.bf16.msra.mxu0 0
    %1392 = vmatprep.subr.bf16.mxu0 0
    %1393 = vmatpush2.bf16.msra.mxu0 0
    %1394 = vmatprep.mubr.bf16.mxu0 0
    %1395 = vmatmul.mubr.bf16.gmra.mxu0 %v1360
    %v1396 = vpop.f32.mrf.mxu0
    %v1397 = vadd.f32 %v265, %v1396
    %v1398 = vpop.f32.mrf.mxu0
    %v1399 = vpop.f32.mrf.mxu0
    %v1400 = vpop.f32.mrf.mxu0
    %1401 = vdwg.mxu0
    %v1402 = vadd.f32 %v248, %v1397
    %v1403 = vxor.u32 %v1402, 2147483648
    %v1404 = vmul.f32 %v1403, 1.442695
    %v1405 = vpow.pop %v1404
    %v1406 = vadd.f32 %v1405, 1.0
    %v1407 = vrcp.pop %v1406
    %v1408 = vmul.f32 1.0, %v1407
    %1410 = vrot.lane.b32.xlu0 %v1397, 64
    %v1411 = vpop.permute.xlu0 %1410
    %v1413 = vmul.f32 %v1408, %v1411
    %1415 = vrot.lane.b32.xlu0 %v1413, 64
    %v1416 = vpop.permute.xlu0 %1415
    %v1418 = vadd.f32 %v248, %v1416
    %v1419 = vtanh.pop %v1418
    %v1420 = vsub.f32 1.0, %v1408
    %1422 = vrot.lane.b32.xlu0 %v1419, 96
    %v1423 = vpop.permute.xlu0 %1422
    %v1425 = vmul.f32 %v1420, %v1423
    %v1426 = vmul.f32 %v1408, %v1353
    %v1427 = vadd.f32 %v1425, %v1426
    %1429 = vrot.lane.b32.xlu0 %v1427, 32
    %v1430 = vpop.permute.xlu0 %1429
    %1432 = vst.msk [vmem:[#allocation2 + $0x18] sm:$0xff] %vm506, %v1430
    %v1433 = vpack.c.bf16 %v1427, %v1427
    %1435 = vrot.lane.b32.xlu0 %v1433, 96
    %v1436 = vpop.permute.xlu0 %1435
    %v1438 = vsel %vm279, %v1436, 0
    %1440 = vmatprep.subr.bf16.mxu0 0
    %1441 = vmatpush1.bf16.msra.mxu0 0
    %1442 = vmatprep.subr.bf16.mxu0 0
    %1443 = vmatpush1.bf16.msra.mxu0 0
    %1444 = vmatprep.subr.bf16.mxu0 0
    %1445 = vmatpush1.bf16.msra.mxu0 0
    %1446 = vmatprep.subr.bf16.mxu0 0
    %1447 = vmatpush1.bf16.msra.mxu0 0
    %1448 = vmatprep.subr.bf16.mxu0 0
    %1449 = vmatpush1.bf16.msra.mxu0 0
    %1450 = vmatprep.subr.bf16.mxu0 0
    %1451 = vmatpush1.bf16.msra.mxu0 0
    %1452 = vmatprep.subr.bf16.mxu0 0
    %1453 = vmatpush1.bf16.msra.mxu0 %v276
    %1454 = vmatprep.subr.bf16.mxu0 0
    %1455 = vmatpush1.bf16.msra.mxu0 %v275
    %1456 = vmatprep.subr.bf16.mxu0 0
    %1457 = vmatpush2.bf16.msra.mxu0 0
    %1458 = vmatprep.subr.bf16.mxu0 0
    %1459 = vmatpush2.bf16.msra.mxu0 0
    %1460 = vmatprep.subr.bf16.mxu0 0
    %1461 = vmatpush2.bf16.msra.mxu0 0
    %1462 = vmatprep.subr.bf16.mxu0 0
    %1463 = vmatpush2.bf16.msra.mxu0 0
    %1464 = vmatprep.subr.bf16.mxu0 0
    %1465 = vmatpush2.bf16.msra.mxu0 0
    %1466 = vmatprep.subr.bf16.mxu0 0
    %1467 = vmatpush2.bf16.msra.mxu0 0
    %1468 = vmatprep.subr.bf16.mxu0 0
    %1469 = vmatpush2.bf16.msra.mxu0 0
    %1470 = vmatprep.subr.bf16.mxu0 0
    %1471 = vmatpush2.bf16.msra.mxu0 0
    %1472 = vmatprep.mubr.bf16.mxu0 0
    %1473 = vmatmul.mubr.bf16.gmra.mxu0 %v1438
    %v1474 = vpop.f32.mrf.mxu0
    %v1475 = vadd.f32 %v265, %v1474
    %v1476 = vpop.f32.mrf.mxu0
    %v1477 = vpop.f32.mrf.mxu0
    %v1478 = vpop.f32.mrf.mxu0
    %1479 = vdwg.mxu0
    %v1480 = vadd.f32 %v253, %v1475
    %v1481 = vxor.u32 %v1480, 2147483648
    %v1482 = vmul.f32 %v1481, 1.442695
    %v1483 = vpow.pop %v1482
    %v1484 = vadd.f32 %v1483, 1.0
    %v1485 = vrcp.pop %v1484
    %v1486 = vmul.f32 1.0, %v1485
    %1488 = vrot.lane.b32.xlu0 %v1475, 64
    %v1489 = vpop.permute.xlu0 %1488
    %v1491 = vmul.f32 %v1486, %v1489
    %1493 = vrot.lane.b32.xlu0 %v1491, 64
    %v1494 = vpop.permute.xlu0 %1493
    %v1496 = vadd.f32 %v253, %v1494
    %v1497 = vtanh.pop %v1496
    %v1498 = vsub.f32 1.0, %v1486
    %1500 = vrot.lane.b32.xlu0 %v1497, 96
    %v1501 = vpop.permute.xlu0 %1500
    %v1503 = vmul.f32 %v1498, %v1501
    %v1504 = vmul.f32 %v1486, %v1427
    %v1505 = vadd.f32 %v1503, %v1504
    %1507 = vrot.lane.b32.xlu0 %v1505, 64
    %v1508 = vpop.permute.xlu0 %1507
    %1510 = vst.msk [vmem:[#allocation2 + $0x18] sm:$0xff] %vm585, %v1508
    %v1511 = vld [vmem:[%s7] sm:$0x1]
    %v1512 = vld [vmem:[%s7 + $0x1] sm:$0x1]
    %v1513 = vld [vmem:[%s7 + $0x2] sm:$0x1]
    %v1514 = vld [vmem:[%s7 + $0x3] sm:$0x1]
    %v1515 = vld [vmem:[%s7 + $0x4] sm:$0x1]
    %v1516 = vld [vmem:[%s7 + $0x5] sm:$0x1]
    %v1517 = vld [vmem:[%s7 + $0x6] sm:$0x1]
    %v1518 = vld [vmem:[%s7 + $0x7] sm:$0x1]
    %v1519 = vld [vmem:[%s7 + $0x8] sm:$0x1]
    %v1520 = vld [vmem:[%s7 + $0x9] sm:$0x1]
    %v1521 = vld [vmem:[%s7 + $0xa] sm:$0x1]
    %v1522 = vld [vmem:[%s7 + $0xb] sm:$0x1]
    %v1523 = vld [vmem:[%s7 + $0xc] sm:$0x1]
    %v1524 = vld [vmem:[%s7 + $0xd] sm:$0x1]
    %v1525 = vld [vmem:[%s7 + $0xe] sm:$0x1]
    %v1526 = vld [vmem:[%s7 + $0xf] sm:$0x1]
    %v1527 = vld [vmem:[%s5] sm:$0xff]
    %v1528 = vld [vmem:[%s5 + $0x8] sm:$0xff]
    %v1545 = vlaneseq
    %v1546 = vshrl.u32 %v1545, 7
    %v1547 = vsub.s32 0, %v1546
    %v1548 = vrot.slane %v1511, %v1547
    %v1549 = vlaneseq
    %v1550 = vshrl.u32 %v1549, 7
    %v1551 = vsub.s32 0, %v1550
    %v1552 = vrot.slane %v1512, %v1551
    %v1553 = vlaneseq
    %v1554 = vshrl.u32 %v1553, 7
    %v1555 = vsub.s32 0, %v1554
    %v1556 = vrot.slane %v1513, %v1555
    %v1557 = vlaneseq
    %v1558 = vshrl.u32 %v1557, 7
    %v1559 = vsub.s32 0, %v1558
    %v1560 = vrot.slane %v1514, %v1559
    %v1561 = vlaneseq
    %v1562 = vshrl.u32 %v1561, 7
    %v1563 = vsub.s32 0, %v1562
    %v1564 = vrot.slane %v1515, %v1563
    %v1565 = vlaneseq
    %v1566 = vshrl.u32 %v1565, 7
    %v1567 = vsub.s32 0, %v1566
    %v1568 = vrot.slane %v1516, %v1567
    %v1569 = vlaneseq
    %v1570 = vshrl.u32 %v1569, 7
    %v1571 = vsub.s32 0, %v1570
    %v1572 = vrot.slane %v1517, %v1571
    %v1573 = vlaneseq
    %v1574 = vshrl.u32 %v1573, 7
    %v1575 = vsub.s32 0, %v1574
    %v1576 = vrot.slane %v1518, %v1575
    %v1577 = vlaneseq
    %v1578 = vshrl.u32 %v1577, 7
    %v1579 = vsub.s32 0, %v1578
    %v1580 = vrot.slane %v1519, %v1579
    %v1581 = vlaneseq
    %v1582 = vshrl.u32 %v1581, 7
    %v1583 = vsub.s32 0, %v1582
    %v1584 = vrot.slane %v1520, %v1583
    %v1585 = vlaneseq
    %v1586 = vshrl.u32 %v1585, 7
    %v1587 = vsub.s32 0, %v1586
    %v1588 = vrot.slane %v1521, %v1587
    %v1589 = vlaneseq
    %v1590 = vshrl.u32 %v1589, 7
    %v1591 = vsub.s32 0, %v1590
    %v1592 = vrot.slane %v1522, %v1591
    %v1593 = vlaneseq
    %v1594 = vshrl.u32 %v1593, 7
    %v1595 = vsub.s32 0, %v1594
    %v1596 = vrot.slane %v1523, %v1595
    %v1597 = vlaneseq
    %v1598 = vshrl.u32 %v1597, 7
    %v1599 = vsub.s32 0, %v1598
    %v1600 = vrot.slane %v1524, %v1599
    %v1601 = vlaneseq
    %v1602 = vshrl.u32 %v1601, 7
    %v1603 = vsub.s32 0, %v1602
    %v1604 = vrot.slane %v1525, %v1603
    %v1605 = vlaneseq
    %v1606 = vshrl.u32 %v1605, 7
    %v1607 = vsub.s32 0, %v1606
    %v1608 = vrot.slane %v1526, %v1607
    %v1625 = vmul.f32 %v1548, %v1527
    %v1626 = vmul.f32 %v1548, %v1528
    %v1627 = vmul.f32 %v1552, %v1527
    %v1628 = vmul.f32 %v1552, %v1528
    %v1629 = vmul.f32 %v1556, %v1527
    %v1630 = vmul.f32 %v1556, %v1528
    %v1631 = vmul.f32 %v1560, %v1527
    %v1632 = vmul.f32 %v1560, %v1528
    %v1633 = vmul.f32 %v1564, %v1527
    %v1634 = vmul.f32 %v1564, %v1528
    %v1635 = vmul.f32 %v1568, %v1527
    %v1636 = vmul.f32 %v1568, %v1528
    %v1637 = vmul.f32 %v1572, %v1527
    %v1638 = vmul.f32 %v1572, %v1528
    %v1639 = vmul.f32 %v1576, %v1527
    %v1640 = vmul.f32 %v1576, %v1528
    %v1641 = vmul.f32 %v1580, %v1527
    %v1642 = vmul.f32 %v1580, %v1528
    %v1643 = vmul.f32 %v1584, %v1527
    %v1644 = vmul.f32 %v1584, %v1528
    %v1645 = vmul.f32 %v1588, %v1527
    %v1646 = vmul.f32 %v1588, %v1528
    %v1647 = vmul.f32 %v1592, %v1527
    %v1648 = vmul.f32 %v1592, %v1528
    %v1649 = vmul.f32 %v1596, %v1527
    %v1650 = vmul.f32 %v1596, %v1528
    %v1651 = vmul.f32 %v1600, %v1527
    %v1652 = vmul.f32 %v1600, %v1528
    %v1653 = vmul.f32 %v1604, %v1527
    %v1654 = vmul.f32 %v1604, %v1528
    %v1655 = vmul.f32 %v1608, %v1527
    %v1656 = vmul.f32 %v1608, %v1528
    %v1657 = vld [vmem:[%s8] sm:$0x1]
    %v1658 = vld [vmem:[%s8 + $0x1] sm:$0x1]
    %v1659 = vld [vmem:[%s8 + $0x2] sm:$0x1]
    %v1660 = vld [vmem:[%s8 + $0x3] sm:$0x1]
    %v1661 = vld [vmem:[%s8 + $0x4] sm:$0x1]
    %v1662 = vld [vmem:[%s8 + $0x5] sm:$0x1]
    %v1663 = vld [vmem:[%s8 + $0x6] sm:$0x1]
    %v1664 = vld [vmem:[%s8 + $0x7] sm:$0x1]
    %v1665 = vld [vmem:[%s8 + $0x8] sm:$0x1]
    %v1666 = vld [vmem:[%s8 + $0x9] sm:$0x1]
    %v1667 = vld [vmem:[%s8 + $0xa] sm:$0x1]
    %v1668 = vld [vmem:[%s8 + $0xb] sm:$0x1]
    %v1669 = vld [vmem:[%s8 + $0xc] sm:$0x1]
    %v1670 = vld [vmem:[%s8 + $0xd] sm:$0x1]
    %v1671 = vld [vmem:[%s8 + $0xe] sm:$0x1]
    %v1672 = vld [vmem:[%s8 + $0xf] sm:$0x1]
    %v1673 = vld [vmem:[%s6] sm:$0xff]
    %v1674 = vld [vmem:[%s6 + $0x8] sm:$0xff]
    %v1691 = vlaneseq
    %v1692 = vshrl.u32 %v1691, 7
    %v1693 = vsub.s32 0, %v1692
    %v1694 = vrot.slane %v1657, %v1693
    %v1695 = vlaneseq
    %v1696 = vshrl.u32 %v1695, 7
    %v1697 = vsub.s32 0, %v1696
    %v1698 = vrot.slane %v1658, %v1697
    %v1699 = vlaneseq
    %v1700 = vshrl.u32 %v1699, 7
    %v1701 = vsub.s32 0, %v1700
    %v1702 = vrot.slane %v1659, %v1701
    %v1703 = vlaneseq
    %v1704 = vshrl.u32 %v1703, 7
    %v1705 = vsub.s32 0, %v1704
    %v1706 = vrot.slane %v1660, %v1705
    %v1707 = vlaneseq
    %v1708 = vshrl.u32 %v1707, 7
    %v1709 = vsub.s32 0, %v1708
    %v1710 = vrot.slane %v1661, %v1709
    %v1711 = vlaneseq
    %v1712 = vshrl.u32 %v1711, 7
    %v1713 = vsub.s32 0, %v1712
    %v1714 = vrot.slane %v1662, %v1713
    %v1715 = vlaneseq
    %v1716 = vshrl.u32 %v1715, 7
    %v1717 = vsub.s32 0, %v1716
    %v1718 = vrot.slane %v1663, %v1717
    %v1719 = vlaneseq
    %v1720 = vshrl.u32 %v1719, 7
    %v1721 = vsub.s32 0, %v1720
    %v1722 = vrot.slane %v1664, %v1721
    %v1723 = vlaneseq
    %v1724 = vshrl.u32 %v1723, 7
    %v1725 = vsub.s32 0, %v1724
    %v1726 = vrot.slane %v1665, %v1725
    %v1727 = vlaneseq
    %v1728 = vshrl.u32 %v1727, 7
    %v1729 = vsub.s32 0, %v1728
    %v1730 = vrot.slane %v1666, %v1729
    %v1731 = vlaneseq
    %v1732 = vshrl.u32 %v1731, 7
    %v1733 = vsub.s32 0, %v1732
    %v1734 = vrot.slane %v1667, %v1733
    %v1735 = vlaneseq
    %v1736 = vshrl.u32 %v1735, 7
    %v1737 = vsub.s32 0, %v1736
    %v1738 = vrot.slane %v1668, %v1737
    %v1739 = vlaneseq
    %v1740 = vshrl.u32 %v1739, 7
    %v1741 = vsub.s32 0, %v1740
    %v1742 = vrot.slane %v1669, %v1741
    %v1743 = vlaneseq
    %v1744 = vshrl.u32 %v1743, 7
    %v1745 = vsub.s32 0, %v1744
    %v1746 = vrot.slane %v1670, %v1745
    %v1747 = vlaneseq
    %v1748 = vshrl.u32 %v1747, 7
    %v1749 = vsub.s32 0, %v1748
    %v1750 = vrot.slane %v1671, %v1749
    %v1751 = vlaneseq
    %v1752 = vshrl.u32 %v1751, 7
    %v1753 = vsub.s32 0, %v1752
    %v1754 = vrot.slane %v1672, %v1753
    %v1771 = vmul.f32 %v1694, %v1673
    %v1772 = vmul.f32 %v1694, %v1674
    %v1773 = vmul.f32 %v1698, %v1673
    %v1774 = vmul.f32 %v1698, %v1674
    %v1775 = vmul.f32 %v1702, %v1673
    %v1776 = vmul.f32 %v1702, %v1674
    %v1777 = vmul.f32 %v1706, %v1673
    %v1778 = vmul.f32 %v1706, %v1674
    %v1779 = vmul.f32 %v1710, %v1673
    %v1780 = vmul.f32 %v1710, %v1674
    %v1781 = vmul.f32 %v1714, %v1673
    %v1782 = vmul.f32 %v1714, %v1674
    %v1783 = vmul.f32 %v1718, %v1673
    %v1784 = vmul.f32 %v1718, %v1674
    %v1785 = vmul.f32 %v1722, %v1673
    %v1786 = vmul.f32 %v1722, %v1674
    %v1787 = vmul.f32 %v1726, %v1673
    %v1788 = vmul.f32 %v1726, %v1674
    %v1789 = vmul.f32 %v1730, %v1673
    %v1790 = vmul.f32 %v1730, %v1674
    %v1791 = vmul.f32 %v1734, %v1673
    %v1792 = vmul.f32 %v1734, %v1674
    %v1793 = vmul.f32 %v1738, %v1673
    %v1794 = vmul.f32 %v1738, %v1674
    %v1795 = vmul.f32 %v1742, %v1673
    %v1796 = vmul.f32 %v1742, %v1674
    %v1797 = vmul.f32 %v1746, %v1673
    %v1798 = vmul.f32 %v1746, %v1674
    %v1799 = vmul.f32 %v1750, %v1673
    %v1800 = vmul.f32 %v1750, %v1674
    %v1801 = vmul.f32 %v1754, %v1673
    %v1802 = vmul.f32 %v1754, %v1674
    %v1803 = vld [vmem:[#allocation2] sm:$0xff]
    %v1804 = vld [vmem:[#allocation2 + $0x8] sm:$0xff]
    %v1805 = vld [vmem:[#allocation2 + $0x10] sm:$0xff]
    %v1806 = vld [vmem:[#allocation2 + $0x18] sm:$0xff]
    %v1807 = vld [vmem:[%s9] sm:$0x1]
    %v1809 = vlaneseq
    %v1810 = vshrl.u32 %v1809, 7
    %v1811 = vsub.s32 0, %v1810
    %v1812 = vrot.slane %v1807, %v1811
    %1814 = vmatprep.subr.mxu0 0.0
    %1815 = vmatpush1.msra.mxu0 %v1778
    %1816 = vmatprep.subr.mxu0 0.0
    %1817 = vmatpush1.msra.mxu0 %v1777
    %1818 = vmatprep.subr.mxu0 0.0
    %1819 = vmatpush1.msra.mxu0 %v1632
    %1820 = vmatprep.subr.mxu0 0.0
    %1821 = vmatpush1.msra.mxu0 %v1631
    %1822 = vmatprep.subr.mxu0 0.0
    %1823 = vmatpush1.msra.mxu0 %v1776
    %1824 = vmatprep.subr.mxu0 0.0
    %1825 = vmatpush1.msra.mxu0 %v1775
    %1826 = vmatprep.subr.mxu0 0.0
    %1827 = vmatpush1.msra.mxu0 %v1630
    %1828 = vmatprep.subr.mxu0 0.0
    %1829 = vmatpush1.msra.mxu0 %v1629
    %1830 = vmatprep.subr.mxu0 0.0
    %1831 = vmatpush1.msra.mxu0 %v1774
    %1832 = vmatprep.subr.mxu0 0.0
    %1833 = vmatpush1.msra.mxu0 %v1773
    %1834 = vmatprep.subr.mxu0 0.0
    %1835 = vmatpush1.msra.mxu0 %v1628
    %1836 = vmatprep.subr.mxu0 0.0
    %1837 = vmatpush1.msra.mxu0 %v1627
    %1838 = vmatprep.subr.mxu0 0.0
    %1839 = vmatpush1.msra.mxu0 %v1772
    %1840 = vmatprep.subr.mxu0 0.0
    %1841 = vmatpush1.msra.mxu0 %v1771
    %1842 = vmatprep.subr.mxu0 0.0
    %1843 = vmatpush1.msra.mxu0 %v1626
    %1844 = vmatprep.subr.mxu0 0.0
    %1845 = vmatpush1.msra.mxu0 %v1625
    %1846 = vmatprep.subr.mxu0 0.0
    %1847 = vmatpush2.msra.mxu0 %v1786
    %1848 = vmatprep.subr.mxu0 0.0
    %1849 = vmatpush2.msra.mxu0 %v1785
    %1850 = vmatprep.subr.mxu0 0.0
    %1851 = vmatpush2.msra.mxu0 %v1640
    %1852 = vmatprep.subr.mxu0 0.0
    %1853 = vmatpush2.msra.mxu0 %v1639
    %1854 = vmatprep.subr.mxu0 0.0
    %1855 = vmatpush2.msra.mxu0 %v1784
    %1856 = vmatprep.subr.mxu0 0.0
    %1857 = vmatpush2.msra.mxu0 %v1783
    %1858 = vmatprep.subr.mxu0 0.0
    %1859 = vmatpush2.msra.mxu0 %v1638
    %1860 = vmatprep.subr.mxu0 0.0
    %1861 = vmatpush2.msra.mxu0 %v1637
    %1862 = vmatprep.subr.mxu0 0.0
    %1863 = vmatpush2.msra.mxu0 %v1782
    %1864 = vmatprep.subr.mxu0 0.0
    %1865 = vmatpush2.msra.mxu0 %v1781
    %1866 = vmatprep.subr.mxu0 0.0
    %1867 = vmatpush2.msra.mxu0 %v1636
    %1868 = vmatprep.subr.mxu0 0.0
    %1869 = vmatpush2.msra.mxu0 %v1635
    %1870 = vmatprep.subr.mxu0 0.0
    %1871 = vmatpush2.msra.mxu0 %v1780
    %1872 = vmatprep.subr.mxu0 0.0
    %1873 = vmatpush2.msra.mxu0 %v1779
    %1874 = vmatprep.subr.mxu0 0.0
    %1875 = vmatpush2.msra.mxu0 %v1634
    %1876 = vmatprep.subr.mxu0 0.0
    %1877 = vmatpush2.msra.mxu0 %v1633
    %1878 = vmatprep.mubr.f32.mxu0 %v1804
    %1879 = vmatmul.mubr.f32.gmra.mxu0 %v1803
    %v1880 = vpop.f32.mrf.mxu0
    %v1881 = vadd.f32 %v1812, %v1880
    %v1882 = vpop.f32.mrf.mxu0
    %1883 = vdwg.mxu0
    %1884 = vmatprep.subr.mxu0 0.0
    %1885 = vmatpush1.msra.mxu0 %v1794
    %1886 = vmatprep.subr.mxu0 0.0
    %1887 = vmatpush1.msra.mxu0 %v1793
    %1888 = vmatprep.subr.mxu0 0.0
    %1889 = vmatpush1.msra.mxu0 %v1648
    %1890 = vmatprep.subr.mxu0 0.0
    %1891 = vmatpush1.msra.mxu0 %v1647
    %1892 = vmatprep.subr.mxu0 0.0
    %1893 = vmatpush1.msra.mxu0 %v1792
    %1894 = vmatprep.subr.mxu0 0.0
    %1895 = vmatpush1.msra.mxu0 %v1791
    %1896 = vmatprep.subr.mxu0 0.0
    %1897 = vmatpush1.msra.mxu0 %v1646
    %1898 = vmatprep.subr.mxu0 0.0
    %1899 = vmatpush1.msra.mxu0 %v1645
    %1900 = vmatprep.subr.mxu0 0.0
    %1901 = vmatpush1.msra.mxu0 %v1790
    %1902 = vmatprep.subr.mxu0 0.0
    %1903 = vmatpush1.msra.mxu0 %v1789
    %1904 = vmatprep.subr.mxu0 0.0
    %1905 = vmatpush1.msra.mxu0 %v1644
    %1906 = vmatprep.subr.mxu0 0.0
    %1907 = vmatpush1.msra.mxu0 %v1643
    %1908 = vmatprep.subr.mxu0 0.0
    %1909 = vmatpush1.msra.mxu0 %v1788
    %1910 = vmatprep.subr.mxu0 0.0
    %1911 = vmatpush1.msra.mxu0 %v1787
    %1912 = vmatprep.subr.mxu0 0.0
    %1913 = vmatpush1.msra.mxu0 %v1642
    %1914 = vmatprep.subr.mxu0 0.0
    %1915 = vmatpush1.msra.mxu0 %v1641
    %1916 = vmatprep.subr.mxu0 0.0
    %1917 = vmatpush2.msra.mxu0 %v1802
    %1918 = vmatprep.subr.mxu0 0.0
    %1919 = vmatpush2.msra.mxu0 %v1801
    %1920 = vmatprep.subr.mxu0 0.0
    %1921 = vmatpush2.msra.mxu0 %v1656
    %1922 = vmatprep.subr.mxu0 0.0
    %1923 = vmatpush2.msra.mxu0 %v1655
    %1924 = vmatprep.subr.mxu0 0.0
    %1925 = vmatpush2.msra.mxu0 %v1800
    %1926 = vmatprep.subr.mxu0 0.0
    %1927 = vmatpush2.msra.mxu0 %v1799
    %1928 = vmatprep.subr.mxu0 0.0
    %1929 = vmatpush2.msra.mxu0 %v1654
    %1930 = vmatprep.subr.mxu0 0.0
    %1931 = vmatpush2.msra.mxu0 %v1653
    %1932 = vmatprep.subr.mxu0 0.0
    %1933 = vmatpush2.msra.mxu0 %v1798
    %1934 = vmatprep.subr.mxu0 0.0
    %1935 = vmatpush2.msra.mxu0 %v1797
    %1936 = vmatprep.subr.mxu0 0.0
    %1937 = vmatpush2.msra.mxu0 %v1652
    %1938 = vmatprep.subr.mxu0 0.0
    %1939 = vmatpush2.msra.mxu0 %v1651
    %1940 = vmatprep.subr.mxu0 0.0
    %1941 = vmatpush2.msra.mxu0 %v1796
    %1942 = vmatprep.subr.mxu0 0.0
    %1943 = vmatpush2.msra.mxu0 %v1795
    %1944 = vmatprep.subr.mxu0 0.0
    %1945 = vmatpush2.msra.mxu0 %v1650
    %1946 = vmatprep.subr.mxu0 0.0
    %1947 = vmatpush2.msra.mxu0 %v1649
    %1948 = vmatprep.mubr.f32.mxu0 %v1806
    %1949 = vmatmul.mubr.f32.gmra.mxu0 %v1805
    %v1950 = vpop.f32.mrf.mxu0
    %v1951 = vadd.f32 %v1881, %v1950
    %v1952 = vpop.f32.mrf.mxu0
    %1953 = vdwg.mxu0
    %1954 = vst [vmem:[#allocation3] sm:$0x3] %v1951
    // Predicated region
    $region42: #{temporal_block.1} parent=1 // pred_check
      _
    $region43: #{temporal_block.1} parent=1 // pred_check_branch
      %1956 = sbr.rel (0) target = $region45
    $region44: #{temporal_block.1} parent=1 // pred_region
      %s1958 = ssub.s32 32, 32
      %1959 = vsyncadd [#allocation4], %s1958
      %s1961 = sshll.u32 [#allocation3], 4
      %s1962 = int_to_ptr.vmem [resolvable:$true] %s1961
      %1964 = dma.vmem_to_hbm [thread:$0]  %s1962, 32, %s10, [#allocation4]
    $region45: #{temporal_block.1} parent=1 // pred_fallthru
      _
    // Predicated region
    $region46: #{temporal_block.1} parent=1 // pred_check
      _
    $region47: #{temporal_block.1} parent=1 // pred_check_branch
      %1966 = sbr.rel (0) target = $region49
    $region48: #{temporal_block.1} parent=1 // pred_region
      %1967 = dma.done [#allocation4], 32
    $region49: #{temporal_block.1} parent=1 // pred_fallthru
      _
    %1968 = vsyncpa [#allocation4], 1

</llo_original>
